<compile_context>
chip_gen: v6e
topology: v6e:2x2x1
jax: 0.10.0
libtpu: 0.0.40
codegen_flags: <defaults>
</compile_context>

<pallas_src>
import math
import numpy as np
import jax
import jax.numpy as jnp
from jax import lax
from jax.experimental import pallas as pl
from jax.experimental.pallas import tpu as pltpu

HIDDEN = 32
BN_EPS = 1e-5


# --------------------------------------------------------------------------
# Kernel
# --------------------------------------------------------------------------
def daelstm_kernel(x2d_ref,                     # (T*B, F)  rows are t*B + b
                   w1_ref, b1_ref,              # (F, 4H), (1, 4H)  enc1 input proj, b = b_ih + b_hh
                   whh1_ref,                    # (H, 4H)           enc1 recurrent
                   w2_ref, b2_ref,              # (2H, 4H), (1,4H)  enc2 [wih2; whh2] stacked
                   wc1_ref, bc1_ref, g1_ref, be1_ref,   # (H,H)(1,H)(1,H)(1,H)
                   wc2_ref, bc2_ref, g2_ref, be2_ref,   # (H,16)(1,16)(1,16)(1,16)
                   wc3_ref, bc3_ref,            # (16,M) (1,M)
                   out_ref):                    # (B, M)
    B = out_ref.shape[0]
    TB = x2d_ref.shape[0]
    T = TB // B
    H = whh1_ref.shape[0]

    # ---- hoisted input projection: ONE lane-dense dot for all timesteps ----
    # (removes one MXU dot + bias broadcast from every step of the recurrence)
    xproj = (jnp.dot(x2d_ref[...], w1_ref[...],
                     preferred_element_type=jnp.float32)
             + b1_ref[...])                     # (T*B, 4H), b1 folded in

    whh1 = whh1_ref[...]                        # (H, 4H)
    w2 = w2_ref[...]                            # (2H, 4H)
    # hoist the layer-2 bias broadcast out of the loop (done once, not T times)
    b2 = jnp.broadcast_to(b2_ref[...], (B, 4 * H))

    def cell(gates, c):
        # Full 128-lane transcendental passes on the EUP, then narrow selects.
        # Gate order (PyTorch): i, f, g, o.
        sig = jax.nn.sigmoid(gates)             # (B, 4H) full width
        th = jnp.tanh(gates)                    # (B, 4H) full width
        i = sig[:, 0 * H:1 * H]
        f = sig[:, 1 * H:2 * H]
        g = th[:, 2 * H:3 * H]
        o = sig[:, 3 * H:4 * H]
        c_new = f * c + i * g
        h_new = o * jnp.tanh(c_new)
        return h_new, c_new

    z = jnp.zeros((B, H), jnp.float32)
    h1, c1, h2, c2 = z, z, z, z

    # T is static and small: full unroll gives the LLO scheduler visibility
    # across timesteps (MXU / EUP / VPU work from adjacent steps can overlap).
    for t in range(T):
        # layer 1: single recurrent dot; input term was precomputed above
        gates1 = (jnp.dot(h1, whh1, preferred_element_type=jnp.float32)
                  + xproj[t * B:(t + 1) * B, :])
        h1, c1 = cell(gates1, c1)
        # layer 2: fused single dot over the concatenated (B, 2H) operand
        cat = jnp.concatenate([h1, h2], axis=-1)            # (B, 2H)
        gates2 = jnp.dot(cat, w2, preferred_element_type=jnp.float32) + b2
        h2, c2 = cell(gates2, c2)

    # ---- classifier head (train-mode BatchNorm: real batch statistics) ----
    a1 = jnp.dot(h2, wc1_ref[...], preferred_element_type=jnp.float32) + bc1_ref[...]
    a1 = jnp.maximum(a1, 0.0)
    m1 = jnp.mean(a1, axis=0, keepdims=True)
    v1 = jnp.mean((a1 - m1) ** 2, axis=0, keepdims=True)
    a1 = (a1 - m1) * lax.rsqrt(v1 + BN_EPS) * g1_ref[...] + be1_ref[...]

    a2 = jnp.dot(a1, wc2_ref[...], preferred_element_type=jnp.float32) + bc2_ref[...]
    a2 = jnp.maximum(a2, 0.0)
    m2 = jnp.mean(a2, axis=0, keepdims=True)
    v2 = jnp.mean((a2 - m2) ** 2, axis=0, keepdims=True)
    a2 = (a2 - m2) * lax.rsqrt(v2 + BN_EPS) * g2_ref[...] + be2_ref[...]

    out = jnp.dot(a2, wc3_ref[...], preferred_element_type=jnp.float32) + bc3_ref[...]
    out_ref[...] = out.astype(out_ref.dtype)


# --------------------------------------------------------------------------
# Parameter init (deterministic, PyTorch-style uniform bounds)
# --------------------------------------------------------------------------
def init_params(key, input_size, modulation_num, hidden=HIDDEN):
    ks = jax.random.split(key, 20)
    k = iter(ks)

    def unif(key_, shape, bound):
        return jax.random.uniform(key_, shape, jnp.float32, -bound, bound)

    sH = 1.0 / math.sqrt(hidden)
    # LSTM layer 1 (PyTorch stores (4H, in); we keep transposed (in, 4H))
    wih1 = unif(next(k), (input_size, 4 * hidden), sH)
    whh1 = unif(next(k), (hidden, 4 * hidden), sH)
    b1 = unif(next(k), (1, 4 * hidden), sH) + unif(next(k), (1, 4 * hidden), sH)  # b_ih + b_hh
    # LSTM layer 2
    wih2 = unif(next(k), (hidden, 4 * hidden), sH)
    whh2 = unif(next(k), (hidden, 4 * hidden), sH)
    b2 = unif(next(k), (1, 4 * hidden), sH) + unif(next(k), (1, 4 * hidden), sH)
    # classifier linears (weights kept as (in, out))
    s32 = 1.0 / math.sqrt(32)
    wc1 = unif(next(k), (hidden, 32), s32)
    bc1 = unif(next(k), (1, 32), s32)
    wc2 = unif(next(k), (32, 16), s32)
    bc2 = unif(next(k), (1, 16), s32)
    s16 = 1.0 / math.sqrt(16)
    wc3 = unif(next(k), (16, modulation_num), s16)
    bc3 = unif(next(k), (1, modulation_num), s16)
    # BatchNorm affine params (PyTorch default init)
    g1 = jnp.ones((1, 32), jnp.float32)
    be1 = jnp.zeros((1, 32), jnp.float32)
    g2 = jnp.ones((1, 16), jnp.float32)
    be2 = jnp.zeros((1, 16), jnp.float32)
    return dict(wih1=wih1, whh1=whh1, b1=b1, wih2=wih2, whh2=whh2, b2=b2,
                wc1=wc1, bc1=bc1, g1=g1, be1=be1,
                wc2=wc2, bc2=bc2, g2=g2, be2=be2,
                wc3=wc3, bc3=bc3)


# --------------------------------------------------------------------------
# Wrapper
# --------------------------------------------------------------------------
def daelstm_forward(x_btf, params, modulation_num):
    """x_btf: (B, T, F) float32 -> (B, modulation_num) float32."""
    B, T, F = x_btf.shape
    # Lane-flatten the sequence once (time-major rows t*B + b) so the whole
    # input projection is a single dot inside the kernel.
    x2d = jnp.transpose(x_btf, (1, 0, 2)).reshape(T * B, F)
    p = params
    # Stack layer-2's input & recurrent weights once (wrapper-side prep).
    w2cat = jnp.concatenate([p["wih2"], p["whh2"]], axis=0)   # (2H, 4H)
    args = (x2d,
            p["wih1"], p["b1"], p["whh1"],
            w2cat, p["b2"],
            p["wc1"], p["bc1"], p["g1"], p["be1"],
            p["wc2"], p["bc2"], p["g2"], p["be2"],
            p["wc3"], p["bc3"])
    vmem = pl.BlockSpec(memory_space=pltpu.MemorySpace.VMEM)
    # Total footprint is a few tens of KB -> everything VMEM-resident, no grid.
    # TODO(synk): for very large batches on v7x, split the batch across the two
    # TensorCores with a separate BatchNorm pass (BN needs full-batch stats).
    return pl.pallas_call(
        daelstm_kernel,
        out_shape=jax.ShapeDtypeStruct((B, modulation_num), jnp.float32),
        in_specs=[vmem] * len(args),
        out_specs=vmem,
    )(*args)


# --------------------------------------------------------------------------
# Pure-JAX reference (for correctness check)
# --------------------------------------------------------------------------
def _ref_lstm_cell(x_t, h, c, w_ih, w_hh, b):
    H = h.shape[-1]
    gates = (jnp.dot(x_t, w_ih, preferred_element_type=jnp.float32)
             + jnp.dot(h, w_hh, preferred_element_type=jnp.float32) + b)
    i = jax.nn.sigmoid(gates[:, 0 * H:1 * H])
    f = jax.nn.sigmoid(gates[:, 1 * H:2 * H])
    g = jnp.tanh(gates[:, 2 * H:3 * H])
    o = jax.nn.sigmoid(gates[:, 3 * H:4 * H])
    c_new = f * c + i * g
    h_new = o * jnp.tanh(c_new)
    return h_new, c_new


def daelstm_reference(x_btf, params):
    p = params
    B, T, F = x_btf.shape
    H = HIDDEN

    def run_lstm(seq, wih, whh, b):
        def step(carry, x_t):
            h, c = carry
            h, c = _ref_lstm_cell(x_t, h, c, wih, whh, b)
            return (h, c), h
        z = jnp.zeros((B, H), jnp.float32)
        (h, _), outs = lax.scan(step, (z, z), jnp.transpose(seq, (1, 0, 2)))
        return jnp.transpose(outs, (1, 0, 2)), h

    o1, _ = run_lstm(x_btf, p["wih1"], p["whh1"], p["b1"])
    _, h2 = run_lstm(o1, p["wih2"], p["whh2"], p["b2"])

    def bn(a, g, be):
        m = jnp.mean(a, axis=0, keepdims=True)
        v = jnp.mean((a - m) ** 2, axis=0, keepdims=True)
        return (a - m) / jnp.sqrt(v + BN_EPS) * g + be

    a1 = bn(jax.nn.relu(h2 @ p["wc1"] + p["bc1"]), p["g1"], p["be1"])
    a2 = bn(jax.nn.relu(a1 @ p["wc2"] + p["bc2"]), p["g2"], p["be2"])
    return a2 @ p["wc3"] + p["bc3"]


if __name__ == "__main__":
    B, T, F = 4, 8, 2             # input_shape = (T, F) -> input_size = F
    MOD = 5                        # modulation_num

    key = jax.random.PRNGKey(0)
    kx, kp = jax.random.split(key)
    x = jax.random.normal(kx, (B, T, F), jnp.float32)
    params = init_params(kp, F, MOD)

    out = daelstm_forward(x, params, MOD)
    out = jax.block_until_ready(out)

    ref = jax.block_until_ready(daelstm_reference(x, params))
    assert out.shape == (B, MOD)
    np.testing.assert_allclose(np.asarray(out), np.asarray(ref),
                               rtol=1e-4, atol=2e-5)

    print("KERNEL_OK")
</pallas_src>

<mosaic_0001>
module attributes {stable_mosaic.version = 11 : i64} {
  func.func @daelstm_kernel(%arg0: memref<32x2xf32, #tpu.memory_space<vmem>>, %arg1: memref<2x128xf32, #tpu.memory_space<vmem>>, %arg2: memref<1x128xf32, #tpu.memory_space<vmem>>, %arg3: memref<32x128xf32, #tpu.memory_space<vmem>>, %arg4: memref<64x128xf32, #tpu.memory_space<vmem>>, %arg5: memref<1x128xf32, #tpu.memory_space<vmem>>, %arg6: memref<32x32xf32, #tpu.memory_space<vmem>>, %arg7: memref<1x32xf32, #tpu.memory_space<vmem>>, %arg8: memref<1x32xf32, #tpu.memory_space<vmem>>, %arg9: memref<1x32xf32, #tpu.memory_space<vmem>>, %arg10: memref<32x16xf32, #tpu.memory_space<vmem>>, %arg11: memref<1x16xf32, #tpu.memory_space<vmem>>, %arg12: memref<1x16xf32, #tpu.memory_space<vmem>>, %arg13: memref<1x16xf32, #tpu.memory_space<vmem>>, %arg14: memref<16x5xf32, #tpu.memory_space<vmem>>, %arg15: memref<1x5xf32, #tpu.memory_space<vmem>>, %arg16: memref<4x5xf32, #tpu.memory_space<vmem>>) attributes {dimension_semantics = [], scalar_prefetch = 0 : i64, scratch_operands = 0 : i64, tpu.core_type = #tpu.core_type<tc>} {
    %c0 = arith.constant 0 : index
    %c0_0 = arith.constant 0 : index
    %0 = vector.load %arg0[%c0, %c0_0] : memref<32x2xf32, #tpu.memory_space<vmem>>, vector<32x2xf32>
    %c0_1 = arith.constant 0 : index
    %c0_2 = arith.constant 0 : index
    %1 = vector.load %arg1[%c0_1, %c0_2] : memref<2x128xf32, #tpu.memory_space<vmem>>, vector<2x128xf32>
    %cst = arith.constant dense<0.000000e+00> : vector<32x128xf32>
    %2 = tpu.matmul %0, %1, %cst {dimension_numbers = #tpu.dot_dimension_numbers<[1], [0], [0], [1], [0, 0, 1, 1], [], []>} : vector<32x2xf32>, vector<2x128xf32>, vector<32x128xf32> -> vector<32x128xf32>
    %c0_3 = arith.constant 0 : index
    %c0_4 = arith.constant 0 : index
    %3 = vector.load %arg2[%c0_3, %c0_4] : memref<1x128xf32, #tpu.memory_space<vmem>>, vector<1x128xf32>
    %4 = vector.broadcast %3 : vector<1x128xf32> to vector<32x128xf32>
    %5 = arith.addf %2, %4 : vector<32x128xf32>
    %c0_5 = arith.constant 0 : index
    %c0_6 = arith.constant 0 : index
    %6 = vector.load %arg3[%c0_5, %c0_6] : memref<32x128xf32, #tpu.memory_space<vmem>>, vector<32x128xf32>
    %c0_7 = arith.constant 0 : index
    %c0_8 = arith.constant 0 : index
    %7 = vector.load %arg4[%c0_7, %c0_8] : memref<64x128xf32, #tpu.memory_space<vmem>>, vector<64x128xf32>
    %c0_9 = arith.constant 0 : index
    %c0_10 = arith.constant 0 : index
    %8 = vector.load %arg5[%c0_9, %c0_10] : memref<1x128xf32, #tpu.memory_space<vmem>>, vector<1x128xf32>
    %9 = vector.shape_cast %8 : vector<1x128xf32> to vector<1x128xf32>
    %10 = vector.broadcast %9 : vector<1x128xf32> to vector<4x128xf32>
    %cst_11 = arith.constant 0.000000e+00 : f32
    %11 = vector.broadcast %cst_11 : f32 to vector<4x32xf32>
    %cst_12 = arith.constant dense<0.000000e+00> : vector<4x128xf32>
    %12 = tpu.matmul %11, %6, %cst_12 {dimension_numbers = #tpu.dot_dimension_numbers<[1], [0], [0], [1], [0, 0, 1, 1], [], []>} : vector<4x32xf32>, vector<32x128xf32>, vector<4x128xf32> -> vector<4x128xf32>
    %13 = vector.extract_strided_slice %5 {offsets = [0, 0], sizes = [4, 128], strides = [1, 1]} : vector<32x128xf32> to vector<4x128xf32>
    %14 = arith.addf %12, %13 : vector<4x128xf32>
    %15 = arith.negf %14 : vector<4x128xf32>
    %16 = math.exp %15 : vector<4x128xf32>
    %cst_13 = arith.constant 1.000000e+00 : f32
    %17 = vector.broadcast %cst_13 : f32 to vector<4x128xf32>
    %18 = arith.addf %17, %16 : vector<4x128xf32>
    %19 = arith.divf %17, %18 : vector<4x128xf32>
    %20 = math.tanh %14 : vector<4x128xf32>
    %21 = vector.extract_strided_slice %19 {offsets = [0, 0], sizes = [4, 32], strides = [1, 1]} : vector<4x128xf32> to vector<4x32xf32>
    %22 = vector.extract_strided_slice %19 {offsets = [0, 32], sizes = [4, 32], strides = [1, 1]} : vector<4x128xf32> to vector<4x32xf32>
    %23 = vector.extract_strided_slice %20 {offsets = [0, 64], sizes = [4, 32], strides = [1, 1]} : vector<4x128xf32> to vector<4x32xf32>
    %24 = vector.extract_strided_slice %19 {offsets = [0, 96], sizes = [4, 32], strides = [1, 1]} : vector<4x128xf32> to vector<4x32xf32>
    %25 = arith.mulf %22, %11 : vector<4x32xf32>
    %26 = arith.mulf %21, %23 : vector<4x32xf32>
    %27 = arith.addf %25, %26 : vector<4x32xf32>
    %28 = math.tanh %27 : vector<4x32xf32>
    %29 = arith.mulf %24, %28 : vector<4x32xf32>
    %30 = tpu.concatenate %29, %11 in 1 : vector<4x32xf32>, vector<4x32xf32> -> vector<4x64xf32>
    %cst_14 = arith.constant dense<0.000000e+00> : vector<4x128xf32>
    %31 = tpu.matmul %30, %7, %cst_14 {dimension_numbers = #tpu.dot_dimension_numbers<[1], [0], [0], [1], [0, 0, 1, 1], [], []>} : vector<4x64xf32>, vector<64x128xf32>, vector<4x128xf32> -> vector<4x128xf32>
    %32 = arith.addf %31, %10 : vector<4x128xf32>
    %33 = arith.negf %32 : vector<4x128xf32>
    %34 = math.exp %33 : vector<4x128xf32>
    %cst_15 = arith.constant 1.000000e+00 : f32
    %35 = vector.broadcast %cst_15 : f32 to vector<4x128xf32>
    %36 = arith.addf %35, %34 : vector<4x128xf32>
    %37 = arith.divf %35, %36 : vector<4x128xf32>
    %38 = math.tanh %32 : vector<4x128xf32>
    %39 = vector.extract_strided_slice %37 {offsets = [0, 0], sizes = [4, 32], strides = [1, 1]} : vector<4x128xf32> to vector<4x32xf32>
    %40 = vector.extract_strided_slice %37 {offsets = [0, 32], sizes = [4, 32], strides = [1, 1]} : vector<4x128xf32> to vector<4x32xf32>
    %41 = vector.extract_strided_slice %38 {offsets = [0, 64], sizes = [4, 32], strides = [1, 1]} : vector<4x128xf32> to vector<4x32xf32>
    %42 = vector.extract_strided_slice %37 {offsets = [0, 96], sizes = [4, 32], strides = [1, 1]} : vector<4x128xf32> to vector<4x32xf32>
    %43 = arith.mulf %40, %11 : vector<4x32xf32>
    %44 = arith.mulf %39, %41 : vector<4x32xf32>
    %45 = arith.addf %43, %44 : vector<4x32xf32>
    %46 = math.tanh %45 : vector<4x32xf32>
    %47 = arith.mulf %42, %46 : vector<4x32xf32>
    %cst_16 = arith.constant dense<0.000000e+00> : vector<4x128xf32>
    %48 = tpu.matmul %29, %6, %cst_16 {dimension_numbers = #tpu.dot_dimension_numbers<[1], [0], [0], [1], [0, 0, 1, 1], [], []>} : vector<4x32xf32>, vector<32x128xf32>, vector<4x128xf32> -> vector<4x128xf32>
    %49 = vector.extract_strided_slice %5 {offsets = [4, 0], sizes = [4, 128], strides = [1, 1]} : vector<32x128xf32> to vector<4x128xf32>
    %50 = arith.addf %48, %49 : vector<4x128xf32>
    %51 = arith.negf %50 : vector<4x128xf32>
    %52 = math.exp %51 : vector<4x128xf32>
    %cst_17 = arith.constant 1.000000e+00 : f32
    %53 = vector.broadcast %cst_17 : f32 to vector<4x128xf32>
    %54 = arith.addf %53, %52 : vector<4x128xf32>
    %55 = arith.divf %53, %54 : vector<4x128xf32>
    %56 = math.tanh %50 : vector<4x128xf32>
    %57 = vector.extract_strided_slice %55 {offsets = [0, 0], sizes = [4, 32], strides = [1, 1]} : vector<4x128xf32> to vector<4x32xf32>
    %58 = vector.extract_strided_slice %55 {offsets = [0, 32], sizes = [4, 32], strides = [1, 1]} : vector<4x128xf32> to vector<4x32xf32>
    %59 = vector.extract_strided_slice %56 {offsets = [0, 64], sizes = [4, 32], strides = [1, 1]} : vector<4x128xf32> to vector<4x32xf32>
    %60 = vector.extract_strided_slice %55 {offsets = [0, 96], sizes = [4, 32], strides = [1, 1]} : vector<4x128xf32> to vector<4x32xf32>
    %61 = arith.mulf %58, %27 : vector<4x32xf32>
    %62 = arith.mulf %57, %59 : vector<4x32xf32>
    %63 = arith.addf %61, %62 : vector<4x32xf32>
    %64 = math.tanh %63 : vector<4x32xf32>
    %65 = arith.mulf %60, %64 : vector<4x32xf32>
    %66 = tpu.concatenate %65, %47 in 1 : vector<4x32xf32>, vector<4x32xf32> -> vector<4x64xf32>
    %cst_18 = arith.constant dense<0.000000e+00> : vector<4x128xf32>
    %67 = tpu.matmul %66, %7, %cst_18 {dimension_numbers = #tpu.dot_dimension_numbers<[1], [0], [0], [1], [0, 0, 1, 1], [], []>} : vector<4x64xf32>, vector<64x128xf32>, vector<4x128xf32> -> vector<4x128xf32>
    %68 = arith.addf %67, %10 : vector<4x128xf32>
    %69 = arith.negf %68 : vector<4x128xf32>
    %70 = math.exp %69 : vector<4x128xf32>
    %cst_19 = arith.constant 1.000000e+00 : f32
    %71 = vector.broadcast %cst_19 : f32 to vector<4x128xf32>
    %72 = arith.addf %71, %70 : vector<4x128xf32>
    %73 = arith.divf %71, %72 : vector<4x128xf32>
    %74 = math.tanh %68 : vector<4x128xf32>
    %75 = vector.extract_strided_slice %73 {offsets = [0, 0], sizes = [4, 32], strides = [1, 1]} : vector<4x128xf32> to vector<4x32xf32>
    %76 = vector.extract_strided_slice %73 {offsets = [0, 32], sizes = [4, 32], strides = [1, 1]} : vector<4x128xf32> to vector<4x32xf32>
    %77 = vector.extract_strided_slice %74 {offsets = [0, 64], sizes = [4, 32], strides = [1, 1]} : vector<4x128xf32> to vector<4x32xf32>
    %78 = vector.extract_strided_slice %73 {offsets = [0, 96], sizes = [4, 32], strides = [1, 1]} : vector<4x128xf32> to vector<4x32xf32>
    %79 = arith.mulf %76, %45 : vector<4x32xf32>
    %80 = arith.mulf %75, %77 : vector<4x32xf32>
    %81 = arith.addf %79, %80 : vector<4x32xf32>
    %82 = math.tanh %81 : vector<4x32xf32>
    %83 = arith.mulf %78, %82 : vector<4x32xf32>
    %cst_20 = arith.constant dense<0.000000e+00> : vector<4x128xf32>
    %84 = tpu.matmul %65, %6, %cst_20 {dimension_numbers = #tpu.dot_dimension_numbers<[1], [0], [0], [1], [0, 0, 1, 1], [], []>} : vector<4x32xf32>, vector<32x128xf32>, vector<4x128xf32> -> vector<4x128xf32>
    %85 = vector.extract_strided_slice %5 {offsets = [8, 0], sizes = [4, 128], strides = [1, 1]} : vector<32x128xf32> to vector<4x128xf32>
    %86 = arith.addf %84, %85 : vector<4x128xf32>
    %87 = arith.negf %86 : vector<4x128xf32>
    %88 = math.exp %87 : vector<4x128xf32>
    %cst_21 = arith.constant 1.000000e+00 : f32
    %89 = vector.broadcast %cst_21 : f32 to vector<4x128xf32>
    %90 = arith.addf %89, %88 : vector<4x128xf32>
    %91 = arith.divf %89, %90 : vector<4x128xf32>
    %92 = math.tanh %86 : vector<4x128xf32>
    %93 = vector.extract_strided_slice %91 {offsets = [0, 0], sizes = [4, 32], strides = [1, 1]} : vector<4x128xf32> to vector<4x32xf32>
    %94 = vector.extract_strided_slice %91 {offsets = [0, 32], sizes = [4, 32], strides = [1, 1]} : vector<4x128xf32> to vector<4x32xf32>
    %95 = vector.extract_strided_slice %92 {offsets = [0, 64], sizes = [4, 32], strides = [1, 1]} : vector<4x128xf32> to vector<4x32xf32>
    %96 = vector.extract_strided_slice %91 {offsets = [0, 96], sizes = [4, 32], strides = [1, 1]} : vector<4x128xf32> to vector<4x32xf32>
    %97 = arith.mulf %94, %63 : vector<4x32xf32>
    %98 = arith.mulf %93, %95 : vector<4x32xf32>
    %99 = arith.addf %97, %98 : vector<4x32xf32>
    %100 = math.tanh %99 : vector<4x32xf32>
    %101 = arith.mulf %96, %100 : vector<4x32xf32>
    %102 = tpu.concatenate %101, %83 in 1 : vector<4x32xf32>, vector<4x32xf32> -> vector<4x64xf32>
    %cst_22 = arith.constant dense<0.000000e+00> : vector<4x128xf32>
    %103 = tpu.matmul %102, %7, %cst_22 {dimension_numbers = #tpu.dot_dimension_numbers<[1], [0], [0], [1], [0, 0, 1, 1], [], []>} : vector<4x64xf32>, vector<64x128xf32>, vector<4x128xf32> -> vector<4x128xf32>
    %104 = arith.addf %103, %10 : vector<4x128xf32>
    %105 = arith.negf %104 : vector<4x128xf32>
    %106 = math.exp %105 : vector<4x128xf32>
    %cst_23 = arith.constant 1.000000e+00 : f32
    %107 = vector.broadcast %cst_23 : f32 to vector<4x128xf32>
    %108 = arith.addf %107, %106 : vector<4x128xf32>
    %109 = arith.divf %107, %108 : vector<4x128xf32>
    %110 = math.tanh %104 : vector<4x128xf32>
    %111 = vector.extract_strided_slice %109 {offsets = [0, 0], sizes = [4, 32], strides = [1, 1]} : vector<4x128xf32> to vector<4x32xf32>
    %112 = vector.extract_strided_slice %109 {offsets = [0, 32], sizes = [4, 32], strides = [1, 1]} : vector<4x128xf32> to vector<4x32xf32>
    %113 = vector.extract_strided_slice %110 {offsets = [0, 64], sizes = [4, 32], strides = [1, 1]} : vector<4x128xf32> to vector<4x32xf32>
    %114 = vector.extract_strided_slice %109 {offsets = [0, 96], sizes = [4, 32], strides = [1, 1]} : vector<4x128xf32> to vector<4x32xf32>
    %115 = arith.mulf %112, %81 : vector<4x32xf32>
    %116 = arith.mulf %111, %113 : vector<4x32xf32>
    %117 = arith.addf %115, %116 : vector<4x32xf32>
    %118 = math.tanh %117 : vector<4x32xf32>
    %119 = arith.mulf %114, %118 : vector<4x32xf32>
    %cst_24 = arith.constant dense<0.000000e+00> : vector<4x128xf32>
    %120 = tpu.matmul %101, %6, %cst_24 {dimension_numbers = #tpu.dot_dimension_numbers<[1], [0], [0], [1], [0, 0, 1, 1], [], []>} : vector<4x32xf32>, vector<32x128xf32>, vector<4x128xf32> -> vector<4x128xf32>
    %121 = vector.extract_strided_slice %5 {offsets = [12, 0], sizes = [4, 128], strides = [1, 1]} : vector<32x128xf32> to vector<4x128xf32>
    %122 = arith.addf %120, %121 : vector<4x128xf32>
    %123 = arith.negf %122 : vector<4x128xf32>
    %124 = math.exp %123 : vector<4x128xf32>
    %cst_25 = arith.constant 1.000000e+00 : f32
    %125 = vector.broadcast %cst_25 : f32 to vector<4x128xf32>
    %126 = arith.addf %125, %124 : vector<4x128xf32>
    %127 = arith.divf %125, %126 : vector<4x128xf32>
    %128 = math.tanh %122 : vector<4x128xf32>
    %129 = vector.extract_strided_slice %127 {offsets = [0, 0], sizes = [4, 32], strides = [1, 1]} : vector<4x128xf32> to vector<4x32xf32>
    %130 = vector.extract_strided_slice %127 {offsets = [0, 32], sizes = [4, 32], strides = [1, 1]} : vector<4x128xf32> to vector<4x32xf32>
    %131 = vector.extract_strided_slice %128 {offsets = [0, 64], sizes = [4, 32], strides = [1, 1]} : vector<4x128xf32> to vector<4x32xf32>
    %132 = vector.extract_strided_slice %127 {offsets = [0, 96], sizes = [4, 32], strides = [1, 1]} : vector<4x128xf32> to vector<4x32xf32>
    %133 = arith.mulf %130, %99 : vector<4x32xf32>
    %134 = arith.mulf %129, %131 : vector<4x32xf32>
    %135 = arith.addf %133, %134 : vector<4x32xf32>
    %136 = math.tanh %135 : vector<4x32xf32>
    %137 = arith.mulf %132, %136 : vector<4x32xf32>
    %138 = tpu.concatenate %137, %119 in 1 : vector<4x32xf32>, vector<4x32xf32> -> vector<4x64xf32>
    %cst_26 = arith.constant dense<0.000000e+00> : vector<4x128xf32>
    %139 = tpu.matmul %138, %7, %cst_26 {dimension_numbers = #tpu.dot_dimension_numbers<[1], [0], [0], [1], [0, 0, 1, 1], [], []>} : vector<4x64xf32>, vector<64x128xf32>, vector<4x128xf32> -> vector<4x128xf32>
    %140 = arith.addf %139, %10 : vector<4x128xf32>
    %141 = arith.negf %140 : vector<4x128xf32>
    %142 = math.exp %141 : vector<4x128xf32>
    %cst_27 = arith.constant 1.000000e+00 : f32
    %143 = vector.broadcast %cst_27 : f32 to vector<4x128xf32>
    %144 = arith.addf %143, %142 : vector<4x128xf32>
    %145 = arith.divf %143, %144 : vector<4x128xf32>
    %146 = math.tanh %140 : vector<4x128xf32>
    %147 = vector.extract_strided_slice %145 {offsets = [0, 0], sizes = [4, 32], strides = [1, 1]} : vector<4x128xf32> to vector<4x32xf32>
    %148 = vector.extract_strided_slice %145 {offsets = [0, 32], sizes = [4, 32], strides = [1, 1]} : vector<4x128xf32> to vector<4x32xf32>
    %149 = vector.extract_strided_slice %146 {offsets = [0, 64], sizes = [4, 32], strides = [1, 1]} : vector<4x128xf32> to vector<4x32xf32>
    %150 = vector.extract_strided_slice %145 {offsets = [0, 96], sizes = [4, 32], strides = [1, 1]} : vector<4x128xf32> to vector<4x32xf32>
    %151 = arith.mulf %148, %117 : vector<4x32xf32>
    %152 = arith.mulf %147, %149 : vector<4x32xf32>
    %153 = arith.addf %151, %152 : vector<4x32xf32>
    %154 = math.tanh %153 : vector<4x32xf32>
    %155 = arith.mulf %150, %154 : vector<4x32xf32>
    %cst_28 = arith.constant dense<0.000000e+00> : vector<4x128xf32>
    %156 = tpu.matmul %137, %6, %cst_28 {dimension_numbers = #tpu.dot_dimension_numbers<[1], [0], [0], [1], [0, 0, 1, 1], [], []>} : vector<4x32xf32>, vector<32x128xf32>, vector<4x128xf32> -> vector<4x128xf32>
    %157 = vector.extract_strided_slice %5 {offsets = [16, 0], sizes = [4, 128], strides = [1, 1]} : vector<32x128xf32> to vector<4x128xf32>
    %158 = arith.addf %156, %157 : vector<4x128xf32>
    %159 = arith.negf %158 : vector<4x128xf32>
    %160 = math.exp %159 : vector<4x128xf32>
    %cst_29 = arith.constant 1.000000e+00 : f32
    %161 = vector.broadcast %cst_29 : f32 to vector<4x128xf32>
    %162 = arith.addf %161, %160 : vector<4x128xf32>
    %163 = arith.divf %161, %162 : vector<4x128xf32>
    %164 = math.tanh %158 : vector<4x128xf32>
    %165 = vector.extract_strided_slice %163 {offsets = [0, 0], sizes = [4, 32], strides = [1, 1]} : vector<4x128xf32> to vector<4x32xf32>
    %166 = vector.extract_strided_slice %163 {offsets = [0, 32], sizes = [4, 32], strides = [1, 1]} : vector<4x128xf32> to vector<4x32xf32>
    %167 = vector.extract_strided_slice %164 {offsets = [0, 64], sizes = [4, 32], strides = [1, 1]} : vector<4x128xf32> to vector<4x32xf32>
    %168 = vector.extract_strided_slice %163 {offsets = [0, 96], sizes = [4, 32], strides = [1, 1]} : vector<4x128xf32> to vector<4x32xf32>
    %169 = arith.mulf %166, %135 : vector<4x32xf32>
    %170 = arith.mulf %165, %167 : vector<4x32xf32>
    %171 = arith.addf %169, %170 : vector<4x32xf32>
    %172 = math.tanh %171 : vector<4x32xf32>
    %173 = arith.mulf %168, %172 : vector<4x32xf32>
    %174 = tpu.concatenate %173, %155 in 1 : vector<4x32xf32>, vector<4x32xf32> -> vector<4x64xf32>
    %cst_30 = arith.constant dense<0.000000e+00> : vector<4x128xf32>
    %175 = tpu.matmul %174, %7, %cst_30 {dimension_numbers = #tpu.dot_dimension_numbers<[1], [0], [0], [1], [0, 0, 1, 1], [], []>} : vector<4x64xf32>, vector<64x128xf32>, vector<4x128xf32> -> vector<4x128xf32>
    %176 = arith.addf %175, %10 : vector<4x128xf32>
    %177 = arith.negf %176 : vector<4x128xf32>
    %178 = math.exp %177 : vector<4x128xf32>
    %cst_31 = arith.constant 1.000000e+00 : f32
    %179 = vector.broadcast %cst_31 : f32 to vector<4x128xf32>
    %180 = arith.addf %179, %178 : vector<4x128xf32>
    %181 = arith.divf %179, %180 : vector<4x128xf32>
    %182 = math.tanh %176 : vector<4x128xf32>
    %183 = vector.extract_strided_slice %181 {offsets = [0, 0], sizes = [4, 32], strides = [1, 1]} : vector<4x128xf32> to vector<4x32xf32>
    %184 = vector.extract_strided_slice %181 {offsets = [0, 32], sizes = [4, 32], strides = [1, 1]} : vector<4x128xf32> to vector<4x32xf32>
    %185 = vector.extract_strided_slice %182 {offsets = [0, 64], sizes = [4, 32], strides = [1, 1]} : vector<4x128xf32> to vector<4x32xf32>
    %186 = vector.extract_strided_slice %181 {offsets = [0, 96], sizes = [4, 32], strides = [1, 1]} : vector<4x128xf32> to vector<4x32xf32>
    %187 = arith.mulf %184, %153 : vector<4x32xf32>
    %188 = arith.mulf %183, %185 : vector<4x32xf32>
    %189 = arith.addf %187, %188 : vector<4x32xf32>
    %190 = math.tanh %189 : vector<4x32xf32>
    %191 = arith.mulf %186, %190 : vector<4x32xf32>
    %cst_32 = arith.constant dense<0.000000e+00> : vector<4x128xf32>
    %192 = tpu.matmul %173, %6, %cst_32 {dimension_numbers = #tpu.dot_dimension_numbers<[1], [0], [0], [1], [0, 0, 1, 1], [], []>} : vector<4x32xf32>, vector<32x128xf32>, vector<4x128xf32> -> vector<4x128xf32>
    %193 = vector.extract_strided_slice %5 {offsets = [20, 0], sizes = [4, 128], strides = [1, 1]} : vector<32x128xf32> to vector<4x128xf32>
    %194 = arith.addf %192, %193 : vector<4x128xf32>
    %195 = arith.negf %194 : vector<4x128xf32>
    %196 = math.exp %195 : vector<4x128xf32>
    %cst_33 = arith.constant 1.000000e+00 : f32
    %197 = vector.broadcast %cst_33 : f32 to vector<4x128xf32>
    %198 = arith.addf %197, %196 : vector<4x128xf32>
    %199 = arith.divf %197, %198 : vector<4x128xf32>
    %200 = math.tanh %194 : vector<4x128xf32>
    %201 = vector.extract_strided_slice %199 {offsets = [0, 0], sizes = [4, 32], strides = [1, 1]} : vector<4x128xf32> to vector<4x32xf32>
    %202 = vector.extract_strided_slice %199 {offsets = [0, 32], sizes = [4, 32], strides = [1, 1]} : vector<4x128xf32> to vector<4x32xf32>
    %203 = vector.extract_strided_slice %200 {offsets = [0, 64], sizes = [4, 32], strides = [1, 1]} : vector<4x128xf32> to vector<4x32xf32>
    %204 = vector.extract_strided_slice %199 {offsets = [0, 96], sizes = [4, 32], strides = [1, 1]} : vector<4x128xf32> to vector<4x32xf32>
    %205 = arith.mulf %202, %171 : vector<4x32xf32>
    %206 = arith.mulf %201, %203 : vector<4x32xf32>
    %207 = arith.addf %205, %206 : vector<4x32xf32>
    %208 = math.tanh %207 : vector<4x32xf32>
    %209 = arith.mulf %204, %208 : vector<4x32xf32>
    %210 = tpu.concatenate %209, %191 in 1 : vector<4x32xf32>, vector<4x32xf32> -> vector<4x64xf32>
    %cst_34 = arith.constant dense<0.000000e+00> : vector<4x128xf32>
    %211 = tpu.matmul %210, %7, %cst_34 {dimension_numbers = #tpu.dot_dimension_numbers<[1], [0], [0], [1], [0, 0, 1, 1], [], []>} : vector<4x64xf32>, vector<64x128xf32>, vector<4x128xf32> -> vector<4x128xf32>
    %212 = arith.addf %211, %10 : vector<4x128xf32>
    %213 = arith.negf %212 : vector<4x128xf32>
    %214 = math.exp %213 : vector<4x128xf32>
    %cst_35 = arith.constant 1.000000e+00 : f32
    %215 = vector.broadcast %cst_35 : f32 to vector<4x128xf32>
    %216 = arith.addf %215, %214 : vector<4x128xf32>
    %217 = arith.divf %215, %216 : vector<4x128xf32>
    %218 = math.tanh %212 : vector<4x128xf32>
    %219 = vector.extract_strided_slice %217 {offsets = [0, 0], sizes = [4, 32], strides = [1, 1]} : vector<4x128xf32> to vector<4x32xf32>
    %220 = vector.extract_strided_slice %217 {offsets = [0, 32], sizes = [4, 32], strides = [1, 1]} : vector<4x128xf32> to vector<4x32xf32>
    %221 = vector.extract_strided_slice %218 {offsets = [0, 64], sizes = [4, 32], strides = [1, 1]} : vector<4x128xf32> to vector<4x32xf32>
    %222 = vector.extract_strided_slice %217 {offsets = [0, 96], sizes = [4, 32], strides = [1, 1]} : vector<4x128xf32> to vector<4x32xf32>
    %223 = arith.mulf %220, %189 : vector<4x32xf32>
    %224 = arith.mulf %219, %221 : vector<4x32xf32>
    %225 = arith.addf %223, %224 : vector<4x32xf32>
    %226 = math.tanh %225 : vector<4x32xf32>
    %227 = arith.mulf %222, %226 : vector<4x32xf32>
    %cst_36 = arith.constant dense<0.000000e+00> : vector<4x128xf32>
    %228 = tpu.matmul %209, %6, %cst_36 {dimension_numbers = #tpu.dot_dimension_numbers<[1], [0], [0], [1], [0, 0, 1, 1], [], []>} : vector<4x32xf32>, vector<32x128xf32>, vector<4x128xf32> -> vector<4x128xf32>
    %229 = vector.extract_strided_slice %5 {offsets = [24, 0], sizes = [4, 128], strides = [1, 1]} : vector<32x128xf32> to vector<4x128xf32>
    %230 = arith.addf %228, %229 : vector<4x128xf32>
    %231 = arith.negf %230 : vector<4x128xf32>
    %232 = math.exp %231 : vector<4x128xf32>
    %cst_37 = arith.constant 1.000000e+00 : f32
    %233 = vector.broadcast %cst_37 : f32 to vector<4x128xf32>
    %234 = arith.addf %233, %232 : vector<4x128xf32>
    %235 = arith.divf %233, %234 : vector<4x128xf32>
    %236 = math.tanh %230 : vector<4x128xf32>
    %237 = vector.extract_strided_slice %235 {offsets = [0, 0], sizes = [4, 32], strides = [1, 1]} : vector<4x128xf32> to vector<4x32xf32>
    %238 = vector.extract_strided_slice %235 {offsets = [0, 32], sizes = [4, 32], strides = [1, 1]} : vector<4x128xf32> to vector<4x32xf32>
    %239 = vector.extract_strided_slice %236 {offsets = [0, 64], sizes = [4, 32], strides = [1, 1]} : vector<4x128xf32> to vector<4x32xf32>
    %240 = vector.extract_strided_slice %235 {offsets = [0, 96], sizes = [4, 32], strides = [1, 1]} : vector<4x128xf32> to vector<4x32xf32>
    %241 = arith.mulf %238, %207 : vector<4x32xf32>
    %242 = arith.mulf %237, %239 : vector<4x32xf32>
    %243 = arith.addf %241, %242 : vector<4x32xf32>
    %244 = math.tanh %243 : vector<4x32xf32>
    %245 = arith.mulf %240, %244 : vector<4x32xf32>
    %246 = tpu.concatenate %245, %227 in 1 : vector<4x32xf32>, vector<4x32xf32> -> vector<4x64xf32>
    %cst_38 = arith.constant dense<0.000000e+00> : vector<4x128xf32>
    %247 = tpu.matmul %246, %7, %cst_38 {dimension_numbers = #tpu.dot_dimension_numbers<[1], [0], [0], [1], [0, 0, 1, 1], [], []>} : vector<4x64xf32>, vector<64x128xf32>, vector<4x128xf32> -> vector<4x128xf32>
    %248 = arith.addf %247, %10 : vector<4x128xf32>
    %249 = arith.negf %248 : vector<4x128xf32>
    %250 = math.exp %249 : vector<4x128xf32>
    %cst_39 = arith.constant 1.000000e+00 : f32
    %251 = vector.broadcast %cst_39 : f32 to vector<4x128xf32>
    %252 = arith.addf %251, %250 : vector<4x128xf32>
    %253 = arith.divf %251, %252 : vector<4x128xf32>
    %254 = math.tanh %248 : vector<4x128xf32>
    %255 = vector.extract_strided_slice %253 {offsets = [0, 0], sizes = [4, 32], strides = [1, 1]} : vector<4x128xf32> to vector<4x32xf32>
    %256 = vector.extract_strided_slice %253 {offsets = [0, 32], sizes = [4, 32], strides = [1, 1]} : vector<4x128xf32> to vector<4x32xf32>
    %257 = vector.extract_strided_slice %254 {offsets = [0, 64], sizes = [4, 32], strides = [1, 1]} : vector<4x128xf32> to vector<4x32xf32>
    %258 = vector.extract_strided_slice %253 {offsets = [0, 96], sizes = [4, 32], strides = [1, 1]} : vector<4x128xf32> to vector<4x32xf32>
    %259 = arith.mulf %256, %225 : vector<4x32xf32>
    %260 = arith.mulf %255, %257 : vector<4x32xf32>
    %261 = arith.addf %259, %260 : vector<4x32xf32>
    %262 = math.tanh %261 : vector<4x32xf32>
    %263 = arith.mulf %258, %262 : vector<4x32xf32>
    %cst_40 = arith.constant dense<0.000000e+00> : vector<4x128xf32>
    %264 = tpu.matmul %245, %6, %cst_40 {dimension_numbers = #tpu.dot_dimension_numbers<[1], [0], [0], [1], [0, 0, 1, 1], [], []>} : vector<4x32xf32>, vector<32x128xf32>, vector<4x128xf32> -> vector<4x128xf32>
    %265 = vector.extract_strided_slice %5 {offsets = [28, 0], sizes = [4, 128], strides = [1, 1]} : vector<32x128xf32> to vector<4x128xf32>
    %266 = arith.addf %264, %265 : vector<4x128xf32>
    %267 = arith.negf %266 : vector<4x128xf32>
    %268 = math.exp %267 : vector<4x128xf32>
    %cst_41 = arith.constant 1.000000e+00 : f32
    %269 = vector.broadcast %cst_41 : f32 to vector<4x128xf32>
    %270 = arith.addf %269, %268 : vector<4x128xf32>
    %271 = arith.divf %269, %270 : vector<4x128xf32>
    %272 = math.tanh %266 : vector<4x128xf32>
    %273 = vector.extract_strided_slice %271 {offsets = [0, 0], sizes = [4, 32], strides = [1, 1]} : vector<4x128xf32> to vector<4x32xf32>
    %274 = vector.extract_strided_slice %271 {offsets = [0, 32], sizes = [4, 32], strides = [1, 1]} : vector<4x128xf32> to vector<4x32xf32>
    %275 = vector.extract_strided_slice %272 {offsets = [0, 64], sizes = [4, 32], strides = [1, 1]} : vector<4x128xf32> to vector<4x32xf32>
    %276 = vector.extract_strided_slice %271 {offsets = [0, 96], sizes = [4, 32], strides = [1, 1]} : vector<4x128xf32> to vector<4x32xf32>
    %277 = arith.mulf %274, %243 : vector<4x32xf32>
    %278 = arith.mulf %273, %275 : vector<4x32xf32>
    %279 = arith.addf %277, %278 : vector<4x32xf32>
    %280 = math.tanh %279 : vector<4x32xf32>
    %281 = arith.mulf %276, %280 : vector<4x32xf32>
    %282 = tpu.concatenate %281, %263 in 1 : vector<4x32xf32>, vector<4x32xf32> -> vector<4x64xf32>
    %cst_42 = arith.constant dense<0.000000e+00> : vector<4x128xf32>
    %283 = tpu.matmul %282, %7, %cst_42 {dimension_numbers = #tpu.dot_dimension_numbers<[1], [0], [0], [1], [0, 0, 1, 1], [], []>} : vector<4x64xf32>, vector<64x128xf32>, vector<4x128xf32> -> vector<4x128xf32>
    %284 = arith.addf %283, %10 : vector<4x128xf32>
    %285 = arith.negf %284 : vector<4x128xf32>
    %286 = math.exp %285 : vector<4x128xf32>
    %cst_43 = arith.constant 1.000000e+00 : f32
    %287 = vector.broadcast %cst_43 : f32 to vector<4x128xf32>
    %288 = arith.addf %287, %286 : vector<4x128xf32>
    %289 = arith.divf %287, %288 : vector<4x128xf32>
    %290 = math.tanh %284 : vector<4x128xf32>
    %291 = vector.extract_strided_slice %289 {offsets = [0, 0], sizes = [4, 32], strides = [1, 1]} : vector<4x128xf32> to vector<4x32xf32>
    %292 = vector.extract_strided_slice %289 {offsets = [0, 32], sizes = [4, 32], strides = [1, 1]} : vector<4x128xf32> to vector<4x32xf32>
    %293 = vector.extract_strided_slice %290 {offsets = [0, 64], sizes = [4, 32], strides = [1, 1]} : vector<4x128xf32> to vector<4x32xf32>
    %294 = vector.extract_strided_slice %289 {offsets = [0, 96], sizes = [4, 32], strides = [1, 1]} : vector<4x128xf32> to vector<4x32xf32>
    %295 = arith.mulf %292, %261 : vector<4x32xf32>
    %296 = arith.mulf %291, %293 : vector<4x32xf32>
    %297 = arith.addf %295, %296 : vector<4x32xf32>
    %298 = math.tanh %297 : vector<4x32xf32>
    %299 = arith.mulf %294, %298 : vector<4x32xf32>
    %c0_44 = arith.constant 0 : index
    %c0_45 = arith.constant 0 : index
    %300 = vector.load %arg6[%c0_44, %c0_45] : memref<32x32xf32, #tpu.memory_space<vmem>>, vector<32x32xf32>
    %cst_46 = arith.constant dense<0.000000e+00> : vector<4x32xf32>
    %301 = tpu.matmul %299, %300, %cst_46 {dimension_numbers = #tpu.dot_dimension_numbers<[1], [0], [0], [1], [0, 0, 1, 1], [], []>} : vector<4x32xf32>, vector<32x32xf32>, vector<4x32xf32> -> vector<4x32xf32>
    %c0_47 = arith.constant 0 : index
    %c0_48 = arith.constant 0 : index
    %302 = vector.load %arg7[%c0_47, %c0_48] : memref<1x32xf32, #tpu.memory_space<vmem>>, vector<1x32xf32>
    %303 = vector.broadcast %302 : vector<1x32xf32> to vector<4x32xf32>
    %304 = arith.addf %301, %303 : vector<4x32xf32>
    %cst_49 = arith.constant 0.000000e+00 : f32
    %305 = vector.broadcast %cst_49 : f32 to vector<4x32xf32>
    %306 = arith.maximumf %304, %305 : vector<4x32xf32>
    %cst_50 = arith.constant dense<0.000000e+00> : vector<32xf32>
    %307 = vector.multi_reduction <add>, %306, %cst_50 [0] : vector<4x32xf32> to vector<32xf32>
    %308 = vector.shape_cast %307 : vector<32xf32> to vector<1x32xf32>
    %cst_51 = arith.constant 4.000000e+00 : f32
    %309 = vector.broadcast %cst_51 : f32 to vector<1x32xf32>
    %310 = arith.divf %308, %309 : vector<1x32xf32>
    %311 = vector.broadcast %310 : vector<1x32xf32> to vector<4x32xf32>
    %312 = arith.subf %306, %311 : vector<4x32xf32>
    %313 = arith.mulf %312, %312 : vector<4x32xf32>
    %cst_52 = arith.constant dense<0.000000e+00> : vector<32xf32>
    %314 = vector.multi_reduction <add>, %313, %cst_52 [0] : vector<4x32xf32> to vector<32xf32>
    %315 = vector.shape_cast %314 : vector<32xf32> to vector<1x32xf32>
    %cst_53 = arith.constant 4.000000e+00 : f32
    %316 = vector.broadcast %cst_53 : f32 to vector<1x32xf32>
    %317 = arith.divf %315, %316 : vector<1x32xf32>
    %318 = vector.broadcast %310 : vector<1x32xf32> to vector<4x32xf32>
    %319 = arith.subf %306, %318 : vector<4x32xf32>
    %cst_54 = arith.constant 9.99999974E-6 : f32
    %320 = vector.broadcast %cst_54 : f32 to vector<1x32xf32>
    %321 = arith.addf %317, %320 : vector<1x32xf32>
    %322 = math.rsqrt %321 : vector<1x32xf32>
    %323 = vector.broadcast %322 : vector<1x32xf32> to vector<4x32xf32>
    %324 = arith.mulf %319, %323 : vector<4x32xf32>
    %c0_55 = arith.constant 0 : index
    %c0_56 = arith.constant 0 : index
    %325 = vector.load %arg8[%c0_55, %c0_56] : memref<1x32xf32, #tpu.memory_space<vmem>>, vector<1x32xf32>
    %326 = vector.broadcast %325 : vector<1x32xf32> to vector<4x32xf32>
    %327 = arith.mulf %324, %326 : vector<4x32xf32>
    %c0_57 = arith.constant 0 : index
    %c0_58 = arith.constant 0 : index
    %328 = vector.load %arg9[%c0_57, %c0_58] : memref<1x32xf32, #tpu.memory_space<vmem>>, vector<1x32xf32>
    %329 = vector.broadcast %328 : vector<1x32xf32> to vector<4x32xf32>
    %330 = arith.addf %327, %329 : vector<4x32xf32>
    %c0_59 = arith.constant 0 : index
    %c0_60 = arith.constant 0 : index
    %331 = vector.load %arg10[%c0_59, %c0_60] : memref<32x16xf32, #tpu.memory_space<vmem>>, vector<32x16xf32>
    %cst_61 = arith.constant dense<0.000000e+00> : vector<4x16xf32>
    %332 = tpu.matmul %330, %331, %cst_61 {dimension_numbers = #tpu.dot_dimension_numbers<[1], [0], [0], [1], [0, 0, 1, 1], [], []>} : vector<4x32xf32>, vector<32x16xf32>, vector<4x16xf32> -> vector<4x16xf32>
    %c0_62 = arith.constant 0 : index
    %c0_63 = arith.constant 0 : index
    %333 = vector.load %arg11[%c0_62, %c0_63] : memref<1x16xf32, #tpu.memory_space<vmem>>, vector<1x16xf32>
    %334 = vector.broadcast %333 : vector<1x16xf32> to vector<4x16xf32>
    %335 = arith.addf %332, %334 : vector<4x16xf32>
    %cst_64 = arith.constant 0.000000e+00 : f32
    %336 = vector.broadcast %cst_64 : f32 to vector<4x16xf32>
    %337 = arith.maximumf %335, %336 : vector<4x16xf32>
    %cst_65 = arith.constant dense<0.000000e+00> : vector<16xf32>
    %338 = vector.multi_reduction <add>, %337, %cst_65 [0] : vector<4x16xf32> to vector<16xf32>
    %339 = vector.shape_cast %338 : vector<16xf32> to vector<1x16xf32>
    %cst_66 = arith.constant 4.000000e+00 : f32
    %340 = vector.broadcast %cst_66 : f32 to vector<1x16xf32>
    %341 = arith.divf %339, %340 : vector<1x16xf32>
    %342 = vector.broadcast %341 : vector<1x16xf32> to vector<4x16xf32>
    %343 = arith.subf %337, %342 : vector<4x16xf32>
    %344 = arith.mulf %343, %343 : vector<4x16xf32>
    %cst_67 = arith.constant dense<0.000000e+00> : vector<16xf32>
    %345 = vector.multi_reduction <add>, %344, %cst_67 [0] : vector<4x16xf32> to vector<16xf32>
    %346 = vector.shape_cast %345 : vector<16xf32> to vector<1x16xf32>
    %cst_68 = arith.constant 4.000000e+00 : f32
    %347 = vector.broadcast %cst_68 : f32 to vector<1x16xf32>
    %348 = arith.divf %346, %347 : vector<1x16xf32>
    %349 = vector.broadcast %341 : vector<1x16xf32> to vector<4x16xf32>
    %350 = arith.subf %337, %349 : vector<4x16xf32>
    %cst_69 = arith.constant 9.99999974E-6 : f32
    %351 = vector.broadcast %cst_69 : f32 to vector<1x16xf32>
    %352 = arith.addf %348, %351 : vector<1x16xf32>
    %353 = math.rsqrt %352 : vector<1x16xf32>
    %354 = vector.broadcast %353 : vector<1x16xf32> to vector<4x16xf32>
    %355 = arith.mulf %350, %354 : vector<4x16xf32>
    %c0_70 = arith.constant 0 : index
    %c0_71 = arith.constant 0 : index
    %356 = vector.load %arg12[%c0_70, %c0_71] : memref<1x16xf32, #tpu.memory_space<vmem>>, vector<1x16xf32>
    %357 = vector.broadcast %356 : vector<1x16xf32> to vector<4x16xf32>
    %358 = arith.mulf %355, %357 : vector<4x16xf32>
    %c0_72 = arith.constant 0 : index
    %c0_73 = arith.constant 0 : index
    %359 = vector.load %arg13[%c0_72, %c0_73] : memref<1x16xf32, #tpu.memory_space<vmem>>, vector<1x16xf32>
    %360 = vector.broadcast %359 : vector<1x16xf32> to vector<4x16xf32>
    %361 = arith.addf %358, %360 : vector<4x16xf32>
    %c0_74 = arith.constant 0 : index
    %c0_75 = arith.constant 0 : index
    %362 = vector.load %arg14[%c0_74, %c0_75] : memref<16x5xf32, #tpu.memory_space<vmem>>, vector<16x5xf32>
    %cst_76 = arith.constant dense<0.000000e+00> : vector<4x5xf32>
    %363 = tpu.matmul %361, %362, %cst_76 {dimension_numbers = #tpu.dot_dimension_numbers<[1], [0], [0], [1], [0, 0, 1, 1], [], []>} : vector<4x16xf32>, vector<16x5xf32>, vector<4x5xf32> -> vector<4x5xf32>
    %c0_77 = arith.constant 0 : index
    %c0_78 = arith.constant 0 : index
    %364 = vector.load %arg15[%c0_77, %c0_78] : memref<1x5xf32, #tpu.memory_space<vmem>>, vector<1x5xf32>
    %365 = vector.broadcast %364 : vector<1x5xf32> to vector<4x5xf32>
    %366 = arith.addf %363, %365 : vector<4x5xf32>
    %c0_79 = arith.constant 0 : index
    %c0_80 = arith.constant 0 : index
    %367 = vector.load %arg16[%c0_79, %c0_80] : memref<4x5xf32, #tpu.memory_space<vmem>>, vector<4x5xf32>
    tpu.vector_store %arg16[%c0_79, %c0_80], %366 {strides = array<i32>} : memref<4x5xf32, #tpu.memory_space<vmem>>, vector<4x5xf32>,
    return
  }
}

</mosaic_0001>

<llo_original>
// kernel: tpu_custom_call.1
$region0: #{tpu_custom_call.1}
  #allocation0 [shape = 'u32[]', space=smem, size = 0x4, offset = 0x4, fixed_abs, tag = 'smem constant byte address 0x4 - core index']
  #allocation1 [shape = 'u32[144,128]{1,0:T(1,128)}', space=vmem, size = 0x12000, scoped, tag = 'internal scratch']
  %s0 = inlined_call_operand.vmem [shape: f32[32,2], index: 0, kind: input, shape index: {}]
  %s1 = inlined_call_operand.vmem [shape: f32[2,128], index: 1, kind: input, shape index: {}]
  %s2 = inlined_call_operand.hbm [shape: f32[1,128], index: 2, kind: input, shape index: {}]
  %s3 = inlined_call_operand.vmem [shape: f32[32,128], index: 3, kind: input, shape index: {}]
  %s4 = inlined_call_operand.vmem [shape: f32[64,128], index: 4, kind: input, shape index: {}]
  %s5 = inlined_call_operand.hbm [shape: f32[1,128], index: 5, kind: input, shape index: {}]
  %s6 = inlined_call_operand.hbm [shape: f32[32,32], index: 6, kind: input, shape index: {}]
  %s7 = inlined_call_operand.hbm [shape: f32[1,32], index: 7, kind: input, shape index: {}]
  %s8 = inlined_call_operand.hbm [shape: f32[1,32], index: 8, kind: input, shape index: {}]
  %s9 = inlined_call_operand.hbm [shape: f32[1,32], index: 9, kind: input, shape index: {}]
  %s10 = inlined_call_operand.vmem [shape: f32[32,16], index: 10, kind: input, shape index: {}]
  %s11 = inlined_call_operand.vmem [shape: f32[1,16], index: 11, kind: input, shape index: {}]
  %s12 = inlined_call_operand.vmem [shape: f32[1,16], index: 12, kind: input, shape index: {}]
  %s13 = inlined_call_operand.vmem [shape: f32[1,16], index: 13, kind: input, shape index: {}]
  %s14 = inlined_call_operand.vmem [shape: f32[16,5], index: 14, kind: input, shape index: {}]
  %s15 = inlined_call_operand.vmem [shape: f32[1,5], index: 15, kind: input, shape index: {}]
  %s16 = inlined_call_operand.hbm [shape: f32[4,5], index: 16, kind: output, shape index: {}]
  %s17 = sld [smem:[#allocation0]]
  $region98: #{tpu_custom_call.1} parent=0
    _
  %s19 = ssub.s32 1, %s17
  %s20 = scalar_select 0, %s19, %s17
  $region1: #{tpu_custom_call.1} parent=0
    #allocation2 [shape = 'u8[512]{0}', space=vmem, size = 0x400, scoped, tag = 'input window, operand 2, single buffered']
    #allocation3 [shape = 's32[1]{0}', space=sflag, size = 0x4, scoped, tag = 'scoped memory for tpu_custom_call.1']
    #allocation4 [shape = 's32[1]{0}', space=sflag, size = 0x4, scoped, tag = 'scoped memory for tpu_custom_call.1']
    #allocation5 [shape = 'u8[512]{0}', space=vmem, size = 0x400, scoped, tag = 'input window, operand 5, single buffered']
    #allocation6 [shape = 's32[1]{0}', space=sflag, size = 0x4, scoped, tag = 'scoped memory for tpu_custom_call.1']
    #allocation7 [shape = 'u8[16384]{0}', space=vmem, size = 0x4000, scoped, tag = 'input window, operand 6, single buffered']
    #allocation8 [shape = 'u8[512]{0}', space=vmem, size = 0x400, scoped, tag = 'input window, operand 7, single buffered']
    #allocation9 [shape = 's32[1]{0}', space=sflag, size = 0x4, scoped, tag = 'scoped memory for tpu_custom_call.1']
    #allocation10 [shape = 'u8[512]{0}', space=vmem, size = 0x400, scoped, tag = 'input window, operand 8, single buffered']
    #allocation11 [shape = 'u8[512]{0}', space=vmem, size = 0x400, scoped, tag = 'input window, operand 9, single buffered']
    #allocation12 [shape = 's32[1]{0}', space=sflag, size = 0x4, scoped, tag = 'scoped memory for tpu_custom_call.1']
    #allocation13 [shape = 'u8[2048]{0}', space=vmem, size = 0x800, scoped, tag = 'output window, operand 0, single buffered']
    %21 = vsyncpa [#allocation3], 0
    %22 = vsyncpa [#allocation6], 0
    %23 = vsyncpa [#allocation9], 0
    %24 = vsyncpa [#allocation12], 0
    %25 = vsyncpa [#allocation4], 0
    // Predicated region
    $region2: #{tpu_custom_call.1} parent=1 // pred_check
      _
    $region3: #{tpu_custom_call.1} parent=1 // pred_check_branch
      %27 = sbr.rel (0) target = $region5
    $region4: #{tpu_custom_call.1} parent=1 // pred_region
      _
    $region5: #{tpu_custom_call.1} parent=1 // pred_fallthru
      _
    // Predicated region
    $region6: #{tpu_custom_call.1} parent=1 // pred_check
      _
    $region7: #{tpu_custom_call.1} parent=1 // pred_check_branch
      %29 = sbr.rel (0) target = $region9
    $region8: #{tpu_custom_call.1} parent=1 // pred_region
      _
    $region9: #{tpu_custom_call.1} parent=1 // pred_fallthru
      _
    // Predicated region
    $region10: #{tpu_custom_call.1} parent=1 // pred_check
      _
    $region11: #{tpu_custom_call.1} parent=1 // pred_check_branch
      %31 = sbr.rel (0) target = $region13
    $region12: #{tpu_custom_call.1} parent=1 // pred_region
      %s33 = ssub.s32 16, 16
      %34 = vsyncadd [#allocation3], %s33
      %s36 = sshll.u32 [#allocation2], 4
      %s37 = int_to_ptr.vmem [resolvable:$true] %s36
      %39 = dma.hbm_to_vmem [thread:$0]  %s2, 16, %s37, [#allocation3]
    $region13: #{tpu_custom_call.1} parent=1 // pred_fallthru
      _
    // Predicated region
    $region14: #{tpu_custom_call.1} parent=1 // pred_check
      _
    $region15: #{tpu_custom_call.1} parent=1 // pred_check_branch
      %41 = sbr.rel (0) target = $region17
    $region16: #{tpu_custom_call.1} parent=1 // pred_region
      _
    $region17: #{tpu_custom_call.1} parent=1 // pred_fallthru
      _
    // Predicated region
    $region18: #{tpu_custom_call.1} parent=1 // pred_check
      _
    $region19: #{tpu_custom_call.1} parent=1 // pred_check_branch
      %43 = sbr.rel (0) target = $region21
    $region20: #{tpu_custom_call.1} parent=1 // pred_region
      _
    $region21: #{tpu_custom_call.1} parent=1 // pred_fallthru
      _
    // Predicated region
    $region22: #{tpu_custom_call.1} parent=1 // pred_check
      _
    $region23: #{tpu_custom_call.1} parent=1 // pred_check_branch
      %45 = sbr.rel (0) target = $region25
    $region24: #{tpu_custom_call.1} parent=1 // pred_region
      %s47 = ssub.s32 16, 16
      %48 = vsyncadd [#allocation6], %s47
      %s50 = sshll.u32 [#allocation5], 4
      %s51 = int_to_ptr.vmem [resolvable:$true] %s50
      %53 = dma.hbm_to_vmem [thread:$0]  %s5, 16, %s51, [#allocation6]
    $region25: #{tpu_custom_call.1} parent=1 // pred_fallthru
      _
    // Predicated region
    $region26: #{tpu_custom_call.1} parent=1 // pred_check
      _
    $region27: #{tpu_custom_call.1} parent=1 // pred_check_branch
      %55 = sbr.rel (0) target = $region29
    $region28: #{tpu_custom_call.1} parent=1 // pred_region
      %s57 = ssub.s32 512, 512
      %58 = vsyncadd [#allocation6], %s57
      %s59 = sshll.u32 [#allocation7], 4
      %s60 = int_to_ptr.vmem [resolvable:$true] %s59
      %65 = dma.hbm_to_vmem [thread:$0]  %s6, 512, %s60, [#allocation6], 128, 128, 8
    $region29: #{tpu_custom_call.1} parent=1 // pred_fallthru
      _
    // Predicated region
    $region30: #{tpu_custom_call.1} parent=1 // pred_check
      _
    $region31: #{tpu_custom_call.1} parent=1 // pred_check_branch
      %67 = sbr.rel (0) target = $region33
    $region32: #{tpu_custom_call.1} parent=1 // pred_region
      %s69 = ssub.s32 16, 16
      %70 = vsyncadd [#allocation9], %s69
      %s72 = sshll.u32 [#allocation8], 4
      %s73 = int_to_ptr.vmem [resolvable:$true] %s72
      %75 = dma.hbm_to_vmem [thread:$0]  %s7, 16, %s73, [#allocation9]
    $region33: #{tpu_custom_call.1} parent=1 // pred_fallthru
      _
    // Predicated region
    $region34: #{tpu_custom_call.1} parent=1 // pred_check
      _
    $region35: #{tpu_custom_call.1} parent=1 // pred_check_branch
      %77 = sbr.rel (0) target = $region37
    $region36: #{tpu_custom_call.1} parent=1 // pred_region
      %s79 = ssub.s32 16, 16
      %80 = vsyncadd [#allocation9], %s79
      %s82 = sshll.u32 [#allocation10], 4
      %s83 = int_to_ptr.vmem [resolvable:$true] %s82
      %85 = dma.hbm_to_vmem [thread:$0]  %s8, 16, %s83, [#allocation9]
    $region37: #{tpu_custom_call.1} parent=1 // pred_fallthru
      _
    // Predicated region
    $region38: #{tpu_custom_call.1} parent=1 // pred_check
      _
    $region39: #{tpu_custom_call.1} parent=1 // pred_check_branch
      %87 = sbr.rel (0) target = $region41
    $region40: #{tpu_custom_call.1} parent=1 // pred_region
      %s89 = ssub.s32 16, 16
      %90 = vsyncadd [#allocation12], %s89
      %s92 = sshll.u32 [#allocation11], 4
      %s93 = int_to_ptr.vmem [resolvable:$true] %s92
      %95 = dma.hbm_to_vmem [thread:$0]  %s9, 16, %s93, [#allocation12]
    $region41: #{tpu_custom_call.1} parent=1 // pred_fallthru
      _
    // Predicated region
    $region42: #{tpu_custom_call.1} parent=1 // pred_check
      _
    $region43: #{tpu_custom_call.1} parent=1 // pred_check_branch
      %97 = sbr.rel (0) target = $region45
    $region44: #{tpu_custom_call.1} parent=1 // pred_region
      _
    $region45: #{tpu_custom_call.1} parent=1 // pred_fallthru
      _
    // Predicated region
    $region46: #{tpu_custom_call.1} parent=1 // pred_check
      _
    $region47: #{tpu_custom_call.1} parent=1 // pred_check_branch
      %99 = sbr.rel (0) target = $region49
    $region48: #{tpu_custom_call.1} parent=1 // pred_region
      _
    $region49: #{tpu_custom_call.1} parent=1 // pred_fallthru
      _
    // Predicated region
    $region50: #{tpu_custom_call.1} parent=1 // pred_check
      _
    $region51: #{tpu_custom_call.1} parent=1 // pred_check_branch
      %101 = sbr.rel (0) target = $region53
    $region52: #{tpu_custom_call.1} parent=1 // pred_region
      _
    $region53: #{tpu_custom_call.1} parent=1 // pred_fallthru
      _
    // Predicated region
    $region54: #{tpu_custom_call.1} parent=1 // pred_check
      _
    $region55: #{tpu_custom_call.1} parent=1 // pred_check_branch
      %103 = sbr.rel (0) target = $region57
    $region56: #{tpu_custom_call.1} parent=1 // pred_region
      _
    $region57: #{tpu_custom_call.1} parent=1 // pred_fallthru
      _
    // Predicated region
    $region58: #{tpu_custom_call.1} parent=1 // pred_check
      _
    $region59: #{tpu_custom_call.1} parent=1 // pred_check_branch
      %105 = sbr.rel (0) target = $region61
    $region60: #{tpu_custom_call.1} parent=1 // pred_region
      _
    $region61: #{tpu_custom_call.1} parent=1 // pred_fallthru
      _
    // Predicated region
    $region62: #{tpu_custom_call.1} parent=1 // pred_check
      _
    $region63: #{tpu_custom_call.1} parent=1 // pred_check_branch
      %107 = sbr.rel (0) target = $region65
    $region64: #{tpu_custom_call.1} parent=1 // pred_region
      _
    $region65: #{tpu_custom_call.1} parent=1 // pred_fallthru
      _
    // Predicated region
    $region66: #{tpu_custom_call.1} parent=1 // pred_check
      _
    $region67: #{tpu_custom_call.1} parent=1 // pred_check_branch
      %109 = sbr.rel (0) target = $region69
    $region68: #{tpu_custom_call.1} parent=1 // pred_region
      %110 = dma.done [#allocation3], 16
    $region69: #{tpu_custom_call.1} parent=1 // pred_fallthru
      _
    // Predicated region
    $region70: #{tpu_custom_call.1} parent=1 // pred_check
      _
    $region71: #{tpu_custom_call.1} parent=1 // pred_check_branch
      %112 = sbr.rel (0) target = $region73
    $region72: #{tpu_custom_call.1} parent=1 // pred_region
      %113 = dma.done [#allocation6], 16
    $region73: #{tpu_custom_call.1} parent=1 // pred_fallthru
      _
    // Predicated region
    $region74: #{tpu_custom_call.1} parent=1 // pred_check
      _
    $region75: #{tpu_custom_call.1} parent=1 // pred_check_branch
      %115 = sbr.rel (0) target = $region77
    $region76: #{tpu_custom_call.1} parent=1 // pred_region
      %116 = dma.done [#allocation6], 512
    $region77: #{tpu_custom_call.1} parent=1 // pred_fallthru
      _
    // Predicated region
    $region78: #{tpu_custom_call.1} parent=1 // pred_check
      _
    $region79: #{tpu_custom_call.1} parent=1 // pred_check_branch
      %118 = sbr.rel (0) target = $region81
    $region80: #{tpu_custom_call.1} parent=1 // pred_region
      %119 = dma.done [#allocation9], 16
    $region81: #{tpu_custom_call.1} parent=1 // pred_fallthru
      _
    // Predicated region
    $region82: #{tpu_custom_call.1} parent=1 // pred_check
      _
    $region83: #{tpu_custom_call.1} parent=1 // pred_check_branch
      %121 = sbr.rel (0) target = $region85
    $region84: #{tpu_custom_call.1} parent=1 // pred_region
      %122 = dma.done [#allocation9], 16
    $region85: #{tpu_custom_call.1} parent=1 // pred_fallthru
      _
    // Predicated region
    $region86: #{tpu_custom_call.1} parent=1 // pred_check
      _
    $region87: #{tpu_custom_call.1} parent=1 // pred_check_branch
      %124 = sbr.rel (0) target = $region89
    $region88: #{tpu_custom_call.1} parent=1 // pred_region
      %125 = dma.done [#allocation12], 16
    $region89: #{tpu_custom_call.1} parent=1 // pred_fallthru
      _
    %v126 = vld [vmem:[%s0] sm:$0xff]
    %v127 = vld [vmem:[%s0 + $0x8] sm:$0xff]
    %v128 = vld [vmem:[%s0 + $0x10] sm:$0xff]
    %v129 = vld [vmem:[%s0 + $0x18] sm:$0xff]
    %v130 = vld [vmem:[%s1] sm:$0x3]
    %v131 = vld [vmem:[#allocation2] sm:$0x1]
    %v133 = vlaneseq
    %v134 = vshrl.u32 %v133, 7
    %v135 = vsub.s32 0, %v134
    %v136 = vrot.slane %v131, %v135
    %vm138 = vcmask 15360
    %v140 = vsel %vm138, %v126, 0
    %v143 = vsel %vm138, %v127, 0
    %v146 = vsel %vm138, %v128, 0
    %v149 = vsel %vm138, %v129, 0
    %vm151 = vcmask 1041408
    %v153 = vsel %vm151, %v130, 0
    %155 = vmatprep.subr.mxu0 0.0
    %156 = vmatpush1.msra.mxu0 0.0
    %157 = vmatprep.subr.mxu0 0.0
    %158 = vmatpush1.msra.mxu0 0.0
    %159 = vmatprep.subr.mxu0 0.0
    %160 = vmatpush1.msra.mxu0 0.0
    %161 = vmatprep.subr.mxu0 0.0
    %162 = vmatpush1.msra.mxu0 0.0
    %163 = vmatprep.subr.mxu0 0.0
    %164 = vmatpush1.msra.mxu0 0.0
    %165 = vmatprep.subr.mxu0 0.0
    %166 = vmatpush1.msra.mxu0 0.0
    %167 = vmatprep.subr.mxu0 0.0
    %168 = vmatpush1.msra.mxu0 0.0
    %169 = vmatprep.subr.mxu0 0.0
    %170 = vmatpush1.msra.mxu0 0.0
    %171 = vmatprep.subr.mxu0 0.0
    %172 = vmatpush1.msra.mxu0 0.0
    %173 = vmatprep.subr.mxu0 0.0
    %174 = vmatpush1.msra.mxu0 0.0
    %175 = vmatprep.subr.mxu0 0.0
    %176 = vmatpush1.msra.mxu0 0.0
    %177 = vmatprep.subr.mxu0 0.0
    %178 = vmatpush1.msra.mxu0 0.0
    %179 = vmatprep.subr.mxu0 0.0
    %180 = vmatpush1.msra.mxu0 0.0
    %181 = vmatprep.subr.mxu0 0.0
    %182 = vmatpush1.msra.mxu0 0.0
    %183 = vmatprep.subr.mxu0 0.0
    %184 = vmatpush1.msra.mxu0 0.0
    %185 = vmatprep.subr.mxu0 0.0
    %186 = vmatpush1.msra.mxu0 %v153
    %187 = vmatprep.subr.mxu0 0.0
    %188 = vmatpush2.msra.mxu0 0.0
    %189 = vmatprep.subr.mxu0 0.0
    %190 = vmatpush2.msra.mxu0 0.0
    %191 = vmatprep.subr.mxu0 0.0
    %192 = vmatpush2.msra.mxu0 0.0
    %193 = vmatprep.subr.mxu0 0.0
    %194 = vmatpush2.msra.mxu0 0.0
    %195 = vmatprep.subr.mxu0 0.0
    %196 = vmatpush2.msra.mxu0 0.0
    %197 = vmatprep.subr.mxu0 0.0
    %198 = vmatpush2.msra.mxu0 0.0
    %199 = vmatprep.subr.mxu0 0.0
    %200 = vmatpush2.msra.mxu0 0.0
    %201 = vmatprep.subr.mxu0 0.0
    %202 = vmatpush2.msra.mxu0 0.0
    %203 = vmatprep.subr.mxu0 0.0
    %204 = vmatpush2.msra.mxu0 0.0
    %205 = vmatprep.subr.mxu0 0.0
    %206 = vmatpush2.msra.mxu0 0.0
    %207 = vmatprep.subr.mxu0 0.0
    %208 = vmatpush2.msra.mxu0 0.0
    %209 = vmatprep.subr.mxu0 0.0
    %210 = vmatpush2.msra.mxu0 0.0
    %211 = vmatprep.subr.mxu0 0.0
    %212 = vmatpush2.msra.mxu0 0.0
    %213 = vmatprep.subr.mxu0 0.0
    %214 = vmatpush2.msra.mxu0 0.0
    %215 = vmatprep.subr.mxu0 0.0
    %216 = vmatpush2.msra.mxu0 0.0
    %217 = vmatprep.subr.mxu0 0.0
    %218 = vmatpush2.msra.mxu0 0.0
    %219 = vmatprep.mubr.f32.mxu0 0.0
    %220 = vmatmul.mubr.f32.gmra.mxu0 %v140
    %v221 = vpop.f32.mrf.mxu0
    %v222 = vadd.f32 %v136, %v221
    %v223 = vpop.f32.mrf.mxu0
    %224 = vmatprep.mubr.f32.mxu0 0.0
    %225 = vmatmul.mubr.f32.gmra.mxu0 %v143
    %v226 = vpop.f32.mrf.mxu0
    %v227 = vadd.f32 %v136, %v226
    %v228 = vpop.f32.mrf.mxu0
    %229 = vmatprep.mubr.f32.mxu0 0.0
    %230 = vmatmul.mubr.f32.gmra.mxu0 %v146
    %v231 = vpop.f32.mrf.mxu0
    %v232 = vadd.f32 %v136, %v231
    %v233 = vpop.f32.mrf.mxu0
    %234 = vmatprep.mubr.f32.mxu0 0.0
    %235 = vmatmul.mubr.f32.gmra.mxu0 %v149
    %v236 = vpop.f32.mrf.mxu0
    %v237 = vadd.f32 %v136, %v236
    %v238 = vpop.f32.mrf.mxu0
    %239 = vdwg.mxu0
    %v240 = vld [vmem:[%s3] sm:$0xff]
    %v241 = vld [vmem:[%s3 + $0x8] sm:$0xff]
    %v242 = vld [vmem:[%s3 + $0x10] sm:$0xff]
    %v243 = vld [vmem:[%s3 + $0x18] sm:$0xff]
    %v244 = vld [vmem:[%s4] sm:$0xff]
    %v245 = vld [vmem:[%s4 + $0x8] sm:$0xff]
    %v246 = vld [vmem:[%s4 + $0x10] sm:$0xff]
    %v247 = vld [vmem:[%s4 + $0x18] sm:$0xff]
    %v248 = vld [vmem:[%s4 + $0x20] sm:$0xff]
    %v249 = vld [vmem:[%s4 + $0x28] sm:$0xff]
    %v250 = vld [vmem:[%s4 + $0x30] sm:$0xff]
    %v251 = vld [vmem:[%s4 + $0x38] sm:$0xff]
    %v252 = vld [vmem:[#allocation5] sm:$0x1]
    %v254 = vlaneseq
    %v255 = vshrl.u32 %v254, 7
    %v256 = vsub.s32 0, %v255
    %v257 = vrot.slane %v252, %v256
    %vm259 = vcmask 261120
    %v261 = vsel %vm259, 0.0, 0
    %263 = vmatprep.subr.mxu0 0.0
    %264 = vmatpush1.msra.mxu0 0.0
    %265 = vmatprep.subr.mxu0 0.0
    %266 = vmatpush1.msra.mxu0 0.0
    %267 = vmatprep.subr.mxu0 0.0
    %268 = vmatpush1.msra.mxu0 0.0
    %269 = vmatprep.subr.mxu0 0.0
    %270 = vmatpush1.msra.mxu0 0.0
    %271 = vmatprep.subr.mxu0 0.0
    %272 = vmatpush1.msra.mxu0 0.0
    %273 = vmatprep.subr.mxu0 0.0
    %274 = vmatpush1.msra.mxu0 0.0
    %275 = vmatprep.subr.mxu0 0.0
    %276 = vmatpush1.msra.mxu0 0.0
    %277 = vmatprep.subr.mxu0 0.0
    %278 = vmatpush1.msra.mxu0 0.0
    %279 = vmatprep.subr.mxu0 0.0
    %280 = vmatpush1.msra.mxu0 0.0
    %281 = vmatprep.subr.mxu0 0.0
    %282 = vmatpush1.msra.mxu0 0.0
    %283 = vmatprep.subr.mxu0 0.0
    %284 = vmatpush1.msra.mxu0 0.0
    %285 = vmatprep.subr.mxu0 0.0
    %286 = vmatpush1.msra.mxu0 0.0
    %287 = vmatprep.subr.mxu0 0.0
    %288 = vmatpush1.msra.mxu0 %v243
    %289 = vmatprep.subr.mxu0 0.0
    %290 = vmatpush1.msra.mxu0 %v242
    %291 = vmatprep.subr.mxu0 0.0
    %292 = vmatpush1.msra.mxu0 %v241
    %293 = vmatprep.subr.mxu0 0.0
    %294 = vmatpush1.msra.mxu0 %v240
    %295 = vmatprep.subr.mxu0 0.0
    %296 = vmatpush2.msra.mxu0 0.0
    %297 = vmatprep.subr.mxu0 0.0
    %298 = vmatpush2.msra.mxu0 0.0
    %299 = vmatprep.subr.mxu0 0.0
    %300 = vmatpush2.msra.mxu0 0.0
    %301 = vmatprep.subr.mxu0 0.0
    %302 = vmatpush2.msra.mxu0 0.0
    %303 = vmatprep.subr.mxu0 0.0
    %304 = vmatpush2.msra.mxu0 0.0
    %305 = vmatprep.subr.mxu0 0.0
    %306 = vmatpush2.msra.mxu0 0.0
    %307 = vmatprep.subr.mxu0 0.0
    %308 = vmatpush2.msra.mxu0 0.0
    %309 = vmatprep.subr.mxu0 0.0
    %310 = vmatpush2.msra.mxu0 0.0
    %311 = vmatprep.subr.mxu0 0.0
    %312 = vmatpush2.msra.mxu0 0.0
    %313 = vmatprep.subr.mxu0 0.0
    %314 = vmatpush2.msra.mxu0 0.0
    %315 = vmatprep.subr.mxu0 0.0
    %316 = vmatpush2.msra.mxu0 0.0
    %317 = vmatprep.subr.mxu0 0.0
    %318 = vmatpush2.msra.mxu0 0.0
    %319 = vmatprep.subr.mxu0 0.0
    %320 = vmatpush2.msra.mxu0 0.0
    %321 = vmatprep.subr.mxu0 0.0
    %322 = vmatpush2.msra.mxu0 0.0
    %323 = vmatprep.subr.mxu0 0.0
    %324 = vmatpush2.msra.mxu0 0.0
    %325 = vmatprep.subr.mxu0 0.0
    %326 = vmatpush2.msra.mxu0 0.0
    %327 = vmatprep.mubr.f32.mxu0 0.0
    %328 = vmatmul.mubr.f32.gmra.mxu0 %v261
    %v329 = vpop.f32.mrf.mxu0
    %v330 = vadd.f32 %v222, %v329
    %v331 = vpop.f32.mrf.mxu0
    %332 = vdwg.mxu0
    %v333 = vxor.u32 %v330, 2147483648
    %v334 = vmul.f32 %v333, 1.442695
    %v335 = vpow.pop %v334
    %v336 = vadd.f32 %v335, 1.0
    %v337 = vrcp.pop %v336
    %v338 = vmul.f32 1.0, %v337
    %v339 = vtanh.pop %v330
    %v340 = vmul.f32 %v338, 0.0
    %342 = vrot.lane.b32.xlu0 %v339, 64
    %v343 = vpop.permute.xlu0 %342
    %v345 = vmul.f32 %v338, %v343
    %347 = vrot.lane.b32.xlu0 %v345, 32
    %v348 = vpop.permute.xlu0 %347
    %v350 = vadd.f32 %v340, %v348
    %v351 = vtanh.pop %v350
    %353 = vrot.lane.b32.xlu0 %v351, 64
    %v354 = vpop.permute.xlu0 %353
    %v356 = vmul.f32 %v338, %v354
    %358 = vrot.lane.b32.xlu0 %v356, 32
    %v359 = vpop.permute.xlu0 %358
    %v361 = vsel %vm259, %v359, 0.0
    %vm362 = vcmask 523264
    %v364 = vsel %vm362, %v361, 0
    %366 = vmatprep.subr.mxu0 0.0
    %367 = vmatpush1.msra.mxu0 0.0
    %368 = vmatprep.subr.mxu0 0.0
    %369 = vmatpush1.msra.mxu0 0.0
    %370 = vmatprep.subr.mxu0 0.0
    %371 = vmatpush1.msra.mxu0 0.0
    %372 = vmatprep.subr.mxu0 0.0
    %373 = vmatpush1.msra.mxu0 0.0
    %374 = vmatprep.subr.mxu0 0.0
    %375 = vmatpush1.msra.mxu0 0.0
    %376 = vmatprep.subr.mxu0 0.0
    %377 = vmatpush1.msra.mxu0 0.0
    %378 = vmatprep.subr.mxu0 0.0
    %379 = vmatpush1.msra.mxu0 0.0
    %380 = vmatprep.subr.mxu0 0.0
    %381 = vmatpush1.msra.mxu0 0.0
    %382 = vmatprep.subr.mxu0 0.0
    %383 = vmatpush1.msra.mxu0 %v251
    %384 = vmatprep.subr.mxu0 0.0
    %385 = vmatpush1.msra.mxu0 %v250
    %386 = vmatprep.subr.mxu0 0.0
    %387 = vmatpush1.msra.mxu0 %v249
    %388 = vmatprep.subr.mxu0 0.0
    %389 = vmatpush1.msra.mxu0 %v248
    %390 = vmatprep.subr.mxu0 0.0
    %391 = vmatpush1.msra.mxu0 %v247
    %392 = vmatprep.subr.mxu0 0.0
    %393 = vmatpush1.msra.mxu0 %v246
    %394 = vmatprep.subr.mxu0 0.0
    %395 = vmatpush1.msra.mxu0 %v245
    %396 = vmatprep.subr.mxu0 0.0
    %397 = vmatpush1.msra.mxu0 %v244
    %398 = vmatprep.subr.mxu0 0.0
    %399 = vmatpush2.msra.mxu0 0.0
    %400 = vmatprep.subr.mxu0 0.0
    %401 = vmatpush2.msra.mxu0 0.0
    %402 = vmatprep.subr.mxu0 0.0
    %403 = vmatpush2.msra.mxu0 0.0
    %404 = vmatprep.subr.mxu0 0.0
    %405 = vmatpush2.msra.mxu0 0.0
    %406 = vmatprep.subr.mxu0 0.0
    %407 = vmatpush2.msra.mxu0 0.0
    %408 = vmatprep.subr.mxu0 0.0
    %409 = vmatpush2.msra.mxu0 0.0
    %410 = vmatprep.subr.mxu0 0.0
    %411 = vmatpush2.msra.mxu0 0.0
    %412 = vmatprep.subr.mxu0 0.0
    %413 = vmatpush2.msra.mxu0 0.0
    %414 = vmatprep.subr.mxu0 0.0
    %415 = vmatpush2.msra.mxu0 0.0
    %416 = vmatprep.subr.mxu0 0.0
    %417 = vmatpush2.msra.mxu0 0.0
    %418 = vmatprep.subr.mxu0 0.0
    %419 = vmatpush2.msra.mxu0 0.0
    %420 = vmatprep.subr.mxu0 0.0
    %421 = vmatpush2.msra.mxu0 0.0
    %422 = vmatprep.subr.mxu0 0.0
    %423 = vmatpush2.msra.mxu0 0.0
    %424 = vmatprep.subr.mxu0 0.0
    %425 = vmatpush2.msra.mxu0 0.0
    %426 = vmatprep.subr.mxu0 0.0
    %427 = vmatpush2.msra.mxu0 0.0
    %428 = vmatprep.subr.mxu0 0.0
    %429 = vmatpush2.msra.mxu0 0.0
    %430 = vmatprep.mubr.f32.mxu0 0.0
    %431 = vmatmul.mubr.f32.gmra.mxu0 %v364
    %v432 = vpop.f32.mrf.mxu0
    %v433 = vadd.f32 %v257, %v432
    %v434 = vpop.f32.mrf.mxu0
    %435 = vdwg.mxu0
    %v436 = vxor.u32 %v433, 2147483648
    %v437 = vmul.f32 %v436, 1.442695
    %v438 = vpow.pop %v437
    %v439 = vadd.f32 %v438, 1.0
    %v440 = vrcp.pop %v439
    %v441 = vmul.f32 1.0, %v440
    %v442 = vtanh.pop %v433
    %v443 = vmul.f32 %v441, 0.0
    %445 = vrot.lane.b32.xlu0 %v442, 64
    %v446 = vpop.permute.xlu0 %445
    %v448 = vmul.f32 %v441, %v446
    %450 = vrot.lane.b32.xlu0 %v448, 32
    %v451 = vpop.permute.xlu0 %450
    %v453 = vadd.f32 %v443, %v451
    %v454 = vtanh.pop %v453
    %456 = vrot.lane.b32.xlu0 %v454, 64
    %v457 = vpop.permute.xlu0 %456
    %v459 = vmul.f32 %v441, %v457
    %v461 = vrot.slane %v222, 4
    %v463 = vsel %vm259, %v359, 0
    %465 = vmatprep.subr.mxu0 0.0
    %466 = vmatpush1.msra.mxu0 0.0
    %467 = vmatprep.subr.mxu0 0.0
    %468 = vmatpush1.msra.mxu0 0.0
    %469 = vmatprep.subr.mxu0 0.0
    %470 = vmatpush1.msra.mxu0 0.0
    %471 = vmatprep.subr.mxu0 0.0
    %472 = vmatpush1.msra.mxu0 0.0
    %473 = vmatprep.subr.mxu0 0.0
    %474 = vmatpush1.msra.mxu0 0.0
    %475 = vmatprep.subr.mxu0 0.0
    %476 = vmatpush1.msra.mxu0 0.0
    %477 = vmatprep.subr.mxu0 0.0
    %478 = vmatpush1.msra.mxu0 0.0
    %479 = vmatprep.subr.mxu0 0.0
    %480 = vmatpush1.msra.mxu0 0.0
    %481 = vmatprep.subr.mxu0 0.0
    %482 = vmatpush1.msra.mxu0 0.0
    %483 = vmatprep.subr.mxu0 0.0
    %484 = vmatpush1.msra.mxu0 0.0
    %485 = vmatprep.subr.mxu0 0.0
    %486 = vmatpush1.msra.mxu0 0.0
    %487 = vmatprep.subr.mxu0 0.0
    %488 = vmatpush1.msra.mxu0 0.0
    %489 = vmatprep.subr.mxu0 0.0
    %490 = vmatpush1.msra.mxu0 %v243
    %491 = vmatprep.subr.mxu0 0.0
    %492 = vmatpush1.msra.mxu0 %v242
    %493 = vmatprep.subr.mxu0 0.0
    %494 = vmatpush1.msra.mxu0 %v241
    %495 = vmatprep.subr.mxu0 0.0
    %496 = vmatpush1.msra.mxu0 %v240
    %497 = vmatprep.subr.mxu0 0.0
    %498 = vmatpush2.msra.mxu0 0.0
    %499 = vmatprep.subr.mxu0 0.0
    %500 = vmatpush2.msra.mxu0 0.0
    %501 = vmatprep.subr.mxu0 0.0
    %502 = vmatpush2.msra.mxu0 0.0
    %503 = vmatprep.subr.mxu0 0.0
    %504 = vmatpush2.msra.mxu0 0.0
    %505 = vmatprep.subr.mxu0 0.0
    %506 = vmatpush2.msra.mxu0 0.0
    %507 = vmatprep.subr.mxu0 0.0
    %508 = vmatpush2.msra.mxu0 0.0
    %509 = vmatprep.subr.mxu0 0.0
    %510 = vmatpush2.msra.mxu0 0.0
    %511 = vmatprep.subr.mxu0 0.0
    %512 = vmatpush2.msra.mxu0 0.0
    %513 = vmatprep.subr.mxu0 0.0
    %514 = vmatpush2.msra.mxu0 0.0
    %515 = vmatprep.subr.mxu0 0.0
    %516 = vmatpush2.msra.mxu0 0.0
    %517 = vmatprep.subr.mxu0 0.0
    %518 = vmatpush2.msra.mxu0 0.0
    %519 = vmatprep.subr.mxu0 0.0
    %520 = vmatpush2.msra.mxu0 0.0
    %521 = vmatprep.subr.mxu0 0.0
    %522 = vmatpush2.msra.mxu0 0.0
    %523 = vmatprep.subr.mxu0 0.0
    %524 = vmatpush2.msra.mxu0 0.0
    %525 = vmatprep.subr.mxu0 0.0
    %526 = vmatpush2.msra.mxu0 0.0
    %527 = vmatprep.subr.mxu0 0.0
    %528 = vmatpush2.msra.mxu0 0.0
    %529 = vmatprep.mubr.f32.mxu0 0.0
    %530 = vmatmul.mubr.f32.gmra.mxu0 %v463
    %v531 = vpop.f32.mrf.mxu0
    %v532 = vadd.f32 %v461, %v531
    %v533 = vpop.f32.mrf.mxu0
    %534 = vdwg.mxu0
    %v535 = vxor.u32 %v532, 2147483648
    %v536 = vmul.f32 %v535, 1.442695
    %v537 = vpow.pop %v536
    %v538 = vadd.f32 %v537, 1.0
    %v539 = vrcp.pop %v538
    %v540 = vmul.f32 1.0, %v539
    %v541 = vtanh.pop %v532
    %v542 = vmul.f32 %v540, %v350
    %544 = vrot.lane.b32.xlu0 %v541, 64
    %v545 = vpop.permute.xlu0 %544
    %v547 = vmul.f32 %v540, %v545
    %549 = vrot.lane.b32.xlu0 %v547, 32
    %v550 = vpop.permute.xlu0 %549
    %v552 = vadd.f32 %v542, %v550
    %v553 = vtanh.pop %v552
    %555 = vrot.lane.b32.xlu0 %v553, 64
    %v556 = vpop.permute.xlu0 %555
    %v558 = vmul.f32 %v540, %v556
    %560 = vrot.lane.b32.xlu0 %v558, 32
    %v561 = vpop.permute.xlu0 %560
    %564 = vrot.lane.b32.xlu0 %v459, 64
    %v565 = vpop.permute.xlu0 %564
    %v567 = vsel %vm259, %v561, %v565
    %v569 = vsel %vm362, %v567, 0
    %571 = vmatprep.subr.mxu0 0.0
    %572 = vmatpush1.msra.mxu0 0.0
    %573 = vmatprep.subr.mxu0 0.0
    %574 = vmatpush1.msra.mxu0 0.0
    %575 = vmatprep.subr.mxu0 0.0
    %576 = vmatpush1.msra.mxu0 0.0
    %577 = vmatprep.subr.mxu0 0.0
    %578 = vmatpush1.msra.mxu0 0.0
    %579 = vmatprep.subr.mxu0 0.0
    %580 = vmatpush1.msra.mxu0 0.0
    %581 = vmatprep.subr.mxu0 0.0
    %582 = vmatpush1.msra.mxu0 0.0
    %583 = vmatprep.subr.mxu0 0.0
    %584 = vmatpush1.msra.mxu0 0.0
    %585 = vmatprep.subr.mxu0 0.0
    %586 = vmatpush1.msra.mxu0 0.0
    %587 = vmatprep.subr.mxu0 0.0
    %588 = vmatpush1.msra.mxu0 %v251
    %589 = vmatprep.subr.mxu0 0.0
    %590 = vmatpush1.msra.mxu0 %v250
    %591 = vmatprep.subr.mxu0 0.0
    %592 = vmatpush1.msra.mxu0 %v249
    %593 = vmatprep.subr.mxu0 0.0
    %594 = vmatpush1.msra.mxu0 %v248
    %595 = vmatprep.subr.mxu0 0.0
    %596 = vmatpush1.msra.mxu0 %v247
    %597 = vmatprep.subr.mxu0 0.0
    %598 = vmatpush1.msra.mxu0 %v246
    %599 = vmatprep.subr.mxu0 0.0
    %600 = vmatpush1.msra.mxu0 %v245
    %601 = vmatprep.subr.mxu0 0.0
    %602 = vmatpush1.msra.mxu0 %v244
    %603 = vmatprep.subr.mxu0 0.0
    %604 = vmatpush2.msra.mxu0 0.0
    %605 = vmatprep.subr.mxu0 0.0
    %606 = vmatpush2.msra.mxu0 0.0
    %607 = vmatprep.subr.mxu0 0.0
    %608 = vmatpush2.msra.mxu0 0.0
    %609 = vmatprep.subr.mxu0 0.0
    %610 = vmatpush2.msra.mxu0 0.0
    %611 = vmatprep.subr.mxu0 0.0
    %612 = vmatpush2.msra.mxu0 0.0
    %613 = vmatprep.subr.mxu0 0.0
    %614 = vmatpush2.msra.mxu0 0.0
    %615 = vmatprep.subr.mxu0 0.0
    %616 = vmatpush2.msra.mxu0 0.0
    %617 = vmatprep.subr.mxu0 0.0
    %618 = vmatpush2.msra.mxu0 0.0
    %619 = vmatprep.subr.mxu0 0.0
    %620 = vmatpush2.msra.mxu0 0.0
    %621 = vmatprep.subr.mxu0 0.0
    %622 = vmatpush2.msra.mxu0 0.0
    %623 = vmatprep.subr.mxu0 0.0
    %624 = vmatpush2.msra.mxu0 0.0
    %625 = vmatprep.subr.mxu0 0.0
    %626 = vmatpush2.msra.mxu0 0.0
    %627 = vmatprep.subr.mxu0 0.0
    %628 = vmatpush2.msra.mxu0 0.0
    %629 = vmatprep.subr.mxu0 0.0
    %630 = vmatpush2.msra.mxu0 0.0
    %631 = vmatprep.subr.mxu0 0.0
    %632 = vmatpush2.msra.mxu0 0.0
    %633 = vmatprep.subr.mxu0 0.0
    %634 = vmatpush2.msra.mxu0 0.0
    %635 = vmatprep.mubr.f32.mxu0 0.0
    %636 = vmatmul.mubr.f32.gmra.mxu0 %v569
    %v637 = vpop.f32.mrf.mxu0
    %v638 = vadd.f32 %v257, %v637
    %v639 = vpop.f32.mrf.mxu0
    %640 = vdwg.mxu0
    %v641 = vxor.u32 %v638, 2147483648
    %v642 = vmul.f32 %v641, 1.442695
    %v643 = vpow.pop %v642
    %v644 = vadd.f32 %v643, 1.0
    %v645 = vrcp.pop %v644
    %v646 = vmul.f32 1.0, %v645
    %v647 = vtanh.pop %v638
    %v648 = vmul.f32 %v646, %v453
    %650 = vrot.lane.b32.xlu0 %v647, 64
    %v651 = vpop.permute.xlu0 %650
    %v653 = vmul.f32 %v646, %v651
    %655 = vrot.lane.b32.xlu0 %v653, 32
    %v656 = vpop.permute.xlu0 %655
    %v658 = vadd.f32 %v648, %v656
    %v659 = vtanh.pop %v658
    %661 = vrot.lane.b32.xlu0 %v659, 64
    %v662 = vpop.permute.xlu0 %661
    %v664 = vmul.f32 %v646, %v662
    %v665 = vsel %vm259, %v561, 0
    %667 = vmatprep.subr.mxu0 0.0
    %668 = vmatpush1.msra.mxu0 0.0
    %669 = vmatprep.subr.mxu0 0.0
    %670 = vmatpush1.msra.mxu0 0.0
    %671 = vmatprep.subr.mxu0 0.0
    %672 = vmatpush1.msra.mxu0 0.0
    %673 = vmatprep.subr.mxu0 0.0
    %674 = vmatpush1.msra.mxu0 0.0
    %675 = vmatprep.subr.mxu0 0.0
    %676 = vmatpush1.msra.mxu0 0.0
    %677 = vmatprep.subr.mxu0 0.0
    %678 = vmatpush1.msra.mxu0 0.0
    %679 = vmatprep.subr.mxu0 0.0
    %680 = vmatpush1.msra.mxu0 0.0
    %681 = vmatprep.subr.mxu0 0.0
    %682 = vmatpush1.msra.mxu0 0.0
    %683 = vmatprep.subr.mxu0 0.0
    %684 = vmatpush1.msra.mxu0 0.0
    %685 = vmatprep.subr.mxu0 0.0
    %686 = vmatpush1.msra.mxu0 0.0
    %687 = vmatprep.subr.mxu0 0.0
    %688 = vmatpush1.msra.mxu0 0.0
    %689 = vmatprep.subr.mxu0 0.0
    %690 = vmatpush1.msra.mxu0 0.0
    %691 = vmatprep.subr.mxu0 0.0
    %692 = vmatpush1.msra.mxu0 %v243
    %693 = vmatprep.subr.mxu0 0.0
    %694 = vmatpush1.msra.mxu0 %v242
    %695 = vmatprep.subr.mxu0 0.0
    %696 = vmatpush1.msra.mxu0 %v241
    %697 = vmatprep.subr.mxu0 0.0
    %698 = vmatpush1.msra.mxu0 %v240
    %699 = vmatprep.subr.mxu0 0.0
    %700 = vmatpush2.msra.mxu0 0.0
    %701 = vmatprep.subr.mxu0 0.0
    %702 = vmatpush2.msra.mxu0 0.0
    %703 = vmatprep.subr.mxu0 0.0
    %704 = vmatpush2.msra.mxu0 0.0
    %705 = vmatprep.subr.mxu0 0.0
    %706 = vmatpush2.msra.mxu0 0.0
    %707 = vmatprep.subr.mxu0 0.0
    %708 = vmatpush2.msra.mxu0 0.0
    %709 = vmatprep.subr.mxu0 0.0
    %710 = vmatpush2.msra.mxu0 0.0
    %711 = vmatprep.subr.mxu0 0.0
    %712 = vmatpush2.msra.mxu0 0.0
    %713 = vmatprep.subr.mxu0 0.0
    %714 = vmatpush2.msra.mxu0 0.0
    %715 = vmatprep.subr.mxu0 0.0
    %716 = vmatpush2.msra.mxu0 0.0
    %717 = vmatprep.subr.mxu0 0.0
    %718 = vmatpush2.msra.mxu0 0.0
    %719 = vmatprep.subr.mxu0 0.0
    %720 = vmatpush2.msra.mxu0 0.0
    %721 = vmatprep.subr.mxu0 0.0
    %722 = vmatpush2.msra.mxu0 0.0
    %723 = vmatprep.subr.mxu0 0.0
    %724 = vmatpush2.msra.mxu0 0.0
    %725 = vmatprep.subr.mxu0 0.0
    %726 = vmatpush2.msra.mxu0 0.0
    %727 = vmatprep.subr.mxu0 0.0
    %728 = vmatpush2.msra.mxu0 0.0
    %729 = vmatprep.subr.mxu0 0.0
    %730 = vmatpush2.msra.mxu0 0.0
    %731 = vmatprep.mubr.f32.mxu0 0.0
    %732 = vmatmul.mubr.f32.gmra.mxu0 %v665
    %v733 = vpop.f32.mrf.mxu0
    %v734 = vadd.f32 %v227, %v733
    %v735 = vpop.f32.mrf.mxu0
    %736 = vdwg.mxu0
    %v737 = vxor.u32 %v734, 2147483648
    %v738 = vmul.f32 %v737, 1.442695
    %v739 = vpow.pop %v738
    %v740 = vadd.f32 %v739, 1.0
    %v741 = vrcp.pop %v740
    %v742 = vmul.f32 1.0, %v741
    %v743 = vtanh.pop %v734
    %v744 = vmul.f32 %v742, %v552
    %746 = vrot.lane.b32.xlu0 %v743, 64
    %v747 = vpop.permute.xlu0 %746
    %v749 = vmul.f32 %v742, %v747
    %751 = vrot.lane.b32.xlu0 %v749, 32
    %v752 = vpop.permute.xlu0 %751
    %v754 = vadd.f32 %v744, %v752
    %v755 = vtanh.pop %v754
    %757 = vrot.lane.b32.xlu0 %v755, 64
    %v758 = vpop.permute.xlu0 %757
    %v760 = vmul.f32 %v742, %v758
    %762 = vrot.lane.b32.xlu0 %v760, 32
    %v763 = vpop.permute.xlu0 %762
    %766 = vrot.lane.b32.xlu0 %v664, 64
    %v767 = vpop.permute.xlu0 %766
    %v769 = vsel %vm259, %v763, %v767
    %v771 = vsel %vm362, %v769, 0
    %773 = vmatprep.subr.mxu0 0.0
    %774 = vmatpush1.msra.mxu0 0.0
    %775 = vmatprep.subr.mxu0 0.0
    %776 = vmatpush1.msra.mxu0 0.0
    %777 = vmatprep.subr.mxu0 0.0
    %778 = vmatpush1.msra.mxu0 0.0
    %779 = vmatprep.subr.mxu0 0.0
    %780 = vmatpush1.msra.mxu0 0.0
    %781 = vmatprep.subr.mxu0 0.0
    %782 = vmatpush1.msra.mxu0 0.0
    %783 = vmatprep.subr.mxu0 0.0
    %784 = vmatpush1.msra.mxu0 0.0
    %785 = vmatprep.subr.mxu0 0.0
    %786 = vmatpush1.msra.mxu0 0.0
    %787 = vmatprep.subr.mxu0 0.0
    %788 = vmatpush1.msra.mxu0 0.0
    %789 = vmatprep.subr.mxu0 0.0
    %790 = vmatpush1.msra.mxu0 %v251
    %791 = vmatprep.subr.mxu0 0.0
    %792 = vmatpush1.msra.mxu0 %v250
    %793 = vmatprep.subr.mxu0 0.0
    %794 = vmatpush1.msra.mxu0 %v249
    %795 = vmatprep.subr.mxu0 0.0
    %796 = vmatpush1.msra.mxu0 %v248
    %797 = vmatprep.subr.mxu0 0.0
    %798 = vmatpush1.msra.mxu0 %v247
    %799 = vmatprep.subr.mxu0 0.0
    %800 = vmatpush1.msra.mxu0 %v246
    %801 = vmatprep.subr.mxu0 0.0
    %802 = vmatpush1.msra.mxu0 %v245
    %803 = vmatprep.subr.mxu0 0.0
    %804 = vmatpush1.msra.mxu0 %v244
    %805 = vmatprep.subr.mxu0 0.0
    %806 = vmatpush2.msra.mxu0 0.0
    %807 = vmatprep.subr.mxu0 0.0
    %808 = vmatpush2.msra.mxu0 0.0
    %809 = vmatprep.subr.mxu0 0.0
    %810 = vmatpush2.msra.mxu0 0.0
    %811 = vmatprep.subr.mxu0 0.0
    %812 = vmatpush2.msra.mxu0 0.0
    %813 = vmatprep.subr.mxu0 0.0
    %814 = vmatpush2.msra.mxu0 0.0
    %815 = vmatprep.subr.mxu0 0.0
    %816 = vmatpush2.msra.mxu0 0.0
    %817 = vmatprep.subr.mxu0 0.0
    %818 = vmatpush2.msra.mxu0 0.0
    %819 = vmatprep.subr.mxu0 0.0
    %820 = vmatpush2.msra.mxu0 0.0
    %821 = vmatprep.subr.mxu0 0.0
    %822 = vmatpush2.msra.mxu0 0.0
    %823 = vmatprep.subr.mxu0 0.0
    %824 = vmatpush2.msra.mxu0 0.0
    %825 = vmatprep.subr.mxu0 0.0
    %826 = vmatpush2.msra.mxu0 0.0
    %827 = vmatprep.subr.mxu0 0.0
    %828 = vmatpush2.msra.mxu0 0.0
    %829 = vmatprep.subr.mxu0 0.0
    %830 = vmatpush2.msra.mxu0 0.0
    %831 = vmatprep.subr.mxu0 0.0
    %832 = vmatpush2.msra.mxu0 0.0
    %833 = vmatprep.subr.mxu0 0.0
    %834 = vmatpush2.msra.mxu0 0.0
    %835 = vmatprep.subr.mxu0 0.0
    %836 = vmatpush2.msra.mxu0 0.0
    %837 = vmatprep.mubr.f32.mxu0 0.0
    %838 = vmatmul.mubr.f32.gmra.mxu0 %v771
    %v839 = vpop.f32.mrf.mxu0
    %v840 = vadd.f32 %v257, %v839
    %v841 = vpop.f32.mrf.mxu0
    %842 = vdwg.mxu0
    %v843 = vxor.u32 %v840, 2147483648
    %v844 = vmul.f32 %v843, 1.442695
    %v845 = vpow.pop %v844
    %v846 = vadd.f32 %v845, 1.0
    %v847 = vrcp.pop %v846
    %v848 = vmul.f32 1.0, %v847
    %v849 = vtanh.pop %v840
    %v850 = vmul.f32 %v848, %v658
    %852 = vrot.lane.b32.xlu0 %v849, 64
    %v853 = vpop.permute.xlu0 %852
    %v855 = vmul.f32 %v848, %v853
    %857 = vrot.lane.b32.xlu0 %v855, 32
    %v858 = vpop.permute.xlu0 %857
    %v860 = vadd.f32 %v850, %v858
    %v861 = vtanh.pop %v860
    %863 = vrot.lane.b32.xlu0 %v861, 64
    %v864 = vpop.permute.xlu0 %863
    %v866 = vmul.f32 %v848, %v864
    %v868 = vrot.slane %v227, 4
    %v870 = vsel %vm259, %v763, 0
    %872 = vmatprep.subr.mxu0 0.0
    %873 = vmatpush1.msra.mxu0 0.0
    %874 = vmatprep.subr.mxu0 0.0
    %875 = vmatpush1.msra.mxu0 0.0
    %876 = vmatprep.subr.mxu0 0.0
    %877 = vmatpush1.msra.mxu0 0.0
    %878 = vmatprep.subr.mxu0 0.0
    %879 = vmatpush1.msra.mxu0 0.0
    %880 = vmatprep.subr.mxu0 0.0
    %881 = vmatpush1.msra.mxu0 0.0
    %882 = vmatprep.subr.mxu0 0.0
    %883 = vmatpush1.msra.mxu0 0.0
    %884 = vmatprep.subr.mxu0 0.0
    %885 = vmatpush1.msra.mxu0 0.0
    %886 = vmatprep.subr.mxu0 0.0
    %887 = vmatpush1.msra.mxu0 0.0
    %888 = vmatprep.subr.mxu0 0.0
    %889 = vmatpush1.msra.mxu0 0.0
    %890 = vmatprep.subr.mxu0 0.0
    %891 = vmatpush1.msra.mxu0 0.0
    %892 = vmatprep.subr.mxu0 0.0
    %893 = vmatpush1.msra.mxu0 0.0
    %894 = vmatprep.subr.mxu0 0.0
    %895 = vmatpush1.msra.mxu0 0.0
    %896 = vmatprep.subr.mxu0 0.0
    %897 = vmatpush1.msra.mxu0 %v243
    %898 = vmatprep.subr.mxu0 0.0
    %899 = vmatpush1.msra.mxu0 %v242
    %900 = vmatprep.subr.mxu0 0.0
    %901 = vmatpush1.msra.mxu0 %v241
    %902 = vmatprep.subr.mxu0 0.0
    %903 = vmatpush1.msra.mxu0 %v240
    %904 = vmatprep.subr.mxu0 0.0
    %905 = vmatpush2.msra.mxu0 0.0
    %906 = vmatprep.subr.mxu0 0.0
    %907 = vmatpush2.msra.mxu0 0.0
    %908 = vmatprep.subr.mxu0 0.0
    %909 = vmatpush2.msra.mxu0 0.0
    %910 = vmatprep.subr.mxu0 0.0
    %911 = vmatpush2.msra.mxu0 0.0
    %912 = vmatprep.subr.mxu0 0.0
    %913 = vmatpush2.msra.mxu0 0.0
    %914 = vmatprep.subr.mxu0 0.0
    %915 = vmatpush2.msra.mxu0 0.0
    %916 = vmatprep.subr.mxu0 0.0
    %917 = vmatpush2.msra.mxu0 0.0
    %918 = vmatprep.subr.mxu0 0.0
    %919 = vmatpush2.msra.mxu0 0.0
    %920 = vmatprep.subr.mxu0 0.0
    %921 = vmatpush2.msra.mxu0 0.0
    %922 = vmatprep.subr.mxu0 0.0
    %923 = vmatpush2.msra.mxu0 0.0
    %924 = vmatprep.subr.mxu0 0.0
    %925 = vmatpush2.msra.mxu0 0.0
    %926 = vmatprep.subr.mxu0 0.0
    %927 = vmatpush2.msra.mxu0 0.0
    %928 = vmatprep.subr.mxu0 0.0
    %929 = vmatpush2.msra.mxu0 0.0
    %930 = vmatprep.subr.mxu0 0.0
    %931 = vmatpush2.msra.mxu0 0.0
    %932 = vmatprep.subr.mxu0 0.0
    %933 = vmatpush2.msra.mxu0 0.0
    %934 = vmatprep.subr.mxu0 0.0
    %935 = vmatpush2.msra.mxu0 0.0
    %936 = vmatprep.mubr.f32.mxu0 0.0
    %937 = vmatmul.mubr.f32.gmra.mxu0 %v870
    %v938 = vpop.f32.mrf.mxu0
    %v939 = vadd.f32 %v868, %v938
    %v940 = vpop.f32.mrf.mxu0
    %941 = vdwg.mxu0
    %v942 = vxor.u32 %v939, 2147483648
    %v943 = vmul.f32 %v942, 1.442695
    %v944 = vpow.pop %v943
    %v945 = vadd.f32 %v944, 1.0
    %v946 = vrcp.pop %v945
    %v947 = vmul.f32 1.0, %v946
    %v948 = vtanh.pop %v939
    %v949 = vmul.f32 %v947, %v754
    %951 = vrot.lane.b32.xlu0 %v948, 64
    %v952 = vpop.permute.xlu0 %951
    %v954 = vmul.f32 %v947, %v952
    %956 = vrot.lane.b32.xlu0 %v954, 32
    %v957 = vpop.permute.xlu0 %956
    %v959 = vadd.f32 %v949, %v957
    %v960 = vtanh.pop %v959
    %962 = vrot.lane.b32.xlu0 %v960, 64
    %v963 = vpop.permute.xlu0 %962
    %v965 = vmul.f32 %v947, %v963
    %967 = vrot.lane.b32.xlu0 %v965, 32
    %v968 = vpop.permute.xlu0 %967
    %971 = vrot.lane.b32.xlu0 %v866, 64
    %v972 = vpop.permute.xlu0 %971
    %v974 = vsel %vm259, %v968, %v972
    %v976 = vsel %vm362, %v974, 0
    %978 = vmatprep.subr.mxu0 0.0
    %979 = vmatpush1.msra.mxu0 0.0
    %980 = vmatprep.subr.mxu0 0.0
    %981 = vmatpush1.msra.mxu0 0.0
    %982 = vmatprep.subr.mxu0 0.0
    %983 = vmatpush1.msra.mxu0 0.0
    %984 = vmatprep.subr.mxu0 0.0
    %985 = vmatpush1.msra.mxu0 0.0
    %986 = vmatprep.subr.mxu0 0.0
    %987 = vmatpush1.msra.mxu0 0.0
    %988 = vmatprep.subr.mxu0 0.0
    %989 = vmatpush1.msra.mxu0 0.0
    %990 = vmatprep.subr.mxu0 0.0
    %991 = vmatpush1.msra.mxu0 0.0
    %992 = vmatprep.subr.mxu0 0.0
    %993 = vmatpush1.msra.mxu0 0.0
    %994 = vmatprep.subr.mxu0 0.0
    %995 = vmatpush1.msra.mxu0 %v251
    %996 = vmatprep.subr.mxu0 0.0
    %997 = vmatpush1.msra.mxu0 %v250
    %998 = vmatprep.subr.mxu0 0.0
    %999 = vmatpush1.msra.mxu0 %v249
    %1000 = vmatprep.subr.mxu0 0.0
    %1001 = vmatpush1.msra.mxu0 %v248
    %1002 = vmatprep.subr.mxu0 0.0
    %1003 = vmatpush1.msra.mxu0 %v247
    %1004 = vmatprep.subr.mxu0 0.0
    %1005 = vmatpush1.msra.mxu0 %v246
    %1006 = vmatprep.subr.mxu0 0.0
    %1007 = vmatpush1.msra.mxu0 %v245
    %1008 = vmatprep.subr.mxu0 0.0
    %1009 = vmatpush1.msra.mxu0 %v244
    %1010 = vmatprep.subr.mxu0 0.0
    %1011 = vmatpush2.msra.mxu0 0.0
    %1012 = vmatprep.subr.mxu0 0.0
    %1013 = vmatpush2.msra.mxu0 0.0
    %1014 = vmatprep.subr.mxu0 0.0
    %1015 = vmatpush2.msra.mxu0 0.0
    %1016 = vmatprep.subr.mxu0 0.0
    %1017 = vmatpush2.msra.mxu0 0.0
    %1018 = vmatprep.subr.mxu0 0.0
    %1019 = vmatpush2.msra.mxu0 0.0
    %1020 = vmatprep.subr.mxu0 0.0
    %1021 = vmatpush2.msra.mxu0 0.0
    %1022 = vmatprep.subr.mxu0 0.0
    %1023 = vmatpush2.msra.mxu0 0.0
    %1024 = vmatprep.subr.mxu0 0.0
    %1025 = vmatpush2.msra.mxu0 0.0
    %1026 = vmatprep.subr.mxu0 0.0
    %1027 = vmatpush2.msra.mxu0 0.0
    %1028 = vmatprep.subr.mxu0 0.0
    %1029 = vmatpush2.msra.mxu0 0.0
    %1030 = vmatprep.subr.mxu0 0.0
    %1031 = vmatpush2.msra.mxu0 0.0
    %1032 = vmatprep.subr.mxu0 0.0
    %1033 = vmatpush2.msra.mxu0 0.0
    %1034 = vmatprep.subr.mxu0 0.0
    %1035 = vmatpush2.msra.mxu0 0.0
    %1036 = vmatprep.subr.mxu0 0.0
    %1037 = vmatpush2.msra.mxu0 0.0
    %1038 = vmatprep.subr.mxu0 0.0
    %1039 = vmatpush2.msra.mxu0 0.0
    %1040 = vmatprep.subr.mxu0 0.0
    %1041 = vmatpush2.msra.mxu0 0.0
    %1042 = vmatprep.mubr.f32.mxu0 0.0
    %1043 = vmatmul.mubr.f32.gmra.mxu0 %v976
    %v1044 = vpop.f32.mrf.mxu0
    %v1045 = vadd.f32 %v257, %v1044
    %v1046 = vpop.f32.mrf.mxu0
    %1047 = vdwg.mxu0
    %v1048 = vxor.u32 %v1045, 2147483648
    %v1049 = vmul.f32 %v1048, 1.442695
    %v1050 = vpow.pop %v1049
    %v1051 = vadd.f32 %v1050, 1.0
    %v1052 = vrcp.pop %v1051
    %v1053 = vmul.f32 1.0, %v1052
    %v1054 = vtanh.pop %v1045
    %v1055 = vmul.f32 %v1053, %v860
    %1057 = vrot.lane.b32.xlu0 %v1054, 64
    %v1058 = vpop.permute.xlu0 %1057
    %v1060 = vmul.f32 %v1053, %v1058
    %1062 = vrot.lane.b32.xlu0 %v1060, 32
    %v1063 = vpop.permute.xlu0 %1062
    %v1065 = vadd.f32 %v1055, %v1063
    %v1066 = vtanh.pop %v1065
    %1068 = vrot.lane.b32.xlu0 %v1066, 64
    %v1069 = vpop.permute.xlu0 %1068
    %v1071 = vmul.f32 %v1053, %v1069
    %v1072 = vsel %vm259, %v968, 0
    %1074 = vmatprep.subr.mxu0 0.0
    %1075 = vmatpush1.msra.mxu0 0.0
    %1076 = vmatprep.subr.mxu0 0.0
    %1077 = vmatpush1.msra.mxu0 0.0
    %1078 = vmatprep.subr.mxu0 0.0
    %1079 = vmatpush1.msra.mxu0 0.0
    %1080 = vmatprep.subr.mxu0 0.0
    %1081 = vmatpush1.msra.mxu0 0.0
    %1082 = vmatprep.subr.mxu0 0.0
    %1083 = vmatpush1.msra.mxu0 0.0
    %1084 = vmatprep.subr.mxu0 0.0
    %1085 = vmatpush1.msra.mxu0 0.0
    %1086 = vmatprep.subr.mxu0 0.0
    %1087 = vmatpush1.msra.mxu0 0.0
    %1088 = vmatprep.subr.mxu0 0.0
    %1089 = vmatpush1.msra.mxu0 0.0
    %1090 = vmatprep.subr.mxu0 0.0
    %1091 = vmatpush1.msra.mxu0 0.0
    %1092 = vmatprep.subr.mxu0 0.0
    %1093 = vmatpush1.msra.mxu0 0.0
    %1094 = vmatprep.subr.mxu0 0.0
    %1095 = vmatpush1.msra.mxu0 0.0
    %1096 = vmatprep.subr.mxu0 0.0
    %1097 = vmatpush1.msra.mxu0 0.0
    %1098 = vmatprep.subr.mxu0 0.0
    %1099 = vmatpush1.msra.mxu0 %v243
    %1100 = vmatprep.subr.mxu0 0.0
    %1101 = vmatpush1.msra.mxu0 %v242
    %1102 = vmatprep.subr.mxu0 0.0
    %1103 = vmatpush1.msra.mxu0 %v241
    %1104 = vmatprep.subr.mxu0 0.0
    %1105 = vmatpush1.msra.mxu0 %v240
    %1106 = vmatprep.subr.mxu0 0.0
    %1107 = vmatpush2.msra.mxu0 0.0
    %1108 = vmatprep.subr.mxu0 0.0
    %1109 = vmatpush2.msra.mxu0 0.0
    %1110 = vmatprep.subr.mxu0 0.0
    %1111 = vmatpush2.msra.mxu0 0.0
    %1112 = vmatprep.subr.mxu0 0.0
    %1113 = vmatpush2.msra.mxu0 0.0
    %1114 = vmatprep.subr.mxu0 0.0
    %1115 = vmatpush2.msra.mxu0 0.0
    %1116 = vmatprep.subr.mxu0 0.0
    %1117 = vmatpush2.msra.mxu0 0.0
    %1118 = vmatprep.subr.mxu0 0.0
    %1119 = vmatpush2.msra.mxu0 0.0
    %1120 = vmatprep.subr.mxu0 0.0
    %1121 = vmatpush2.msra.mxu0 0.0
    %1122 = vmatprep.subr.mxu0 0.0
    %1123 = vmatpush2.msra.mxu0 0.0
    %1124 = vmatprep.subr.mxu0 0.0
    %1125 = vmatpush2.msra.mxu0 0.0
    %1126 = vmatprep.subr.mxu0 0.0
    %1127 = vmatpush2.msra.mxu0 0.0
    %1128 = vmatprep.subr.mxu0 0.0
    %1129 = vmatpush2.msra.mxu0 0.0
    %1130 = vmatprep.subr.mxu0 0.0
    %1131 = vmatpush2.msra.mxu0 0.0
    %1132 = vmatprep.subr.mxu0 0.0
    %1133 = vmatpush2.msra.mxu0 0.0
    %1134 = vmatprep.subr.mxu0 0.0
    %1135 = vmatpush2.msra.mxu0 0.0
    %1136 = vmatprep.subr.mxu0 0.0
    %1137 = vmatpush2.msra.mxu0 0.0
    %1138 = vmatprep.mubr.f32.mxu0 0.0
    %1139 = vmatmul.mubr.f32.gmra.mxu0 %v1072
    %v1140 = vpop.f32.mrf.mxu0
    %v1141 = vadd.f32 %v232, %v1140
    %v1142 = vpop.f32.mrf.mxu0
    %1143 = vdwg.mxu0
    %v1144 = vxor.u32 %v1141, 2147483648
    %v1145 = vmul.f32 %v1144, 1.442695
    %v1146 = vpow.pop %v1145
    %v1147 = vadd.f32 %v1146, 1.0
    %v1148 = vrcp.pop %v1147
    %v1149 = vmul.f32 1.0, %v1148
    %v1150 = vtanh.pop %v1141
    %v1151 = vmul.f32 %v1149, %v959
    %1153 = vrot.lane.b32.xlu0 %v1150, 64
    %v1154 = vpop.permute.xlu0 %1153
    %v1156 = vmul.f32 %v1149, %v1154
    %1158 = vrot.lane.b32.xlu0 %v1156, 32
    %v1159 = vpop.permute.xlu0 %1158
    %v1161 = vadd.f32 %v1151, %v1159
    %v1162 = vtanh.pop %v1161
    %1164 = vrot.lane.b32.xlu0 %v1162, 64
    %v1165 = vpop.permute.xlu0 %1164
    %v1167 = vmul.f32 %v1149, %v1165
    %1169 = vrot.lane.b32.xlu0 %v1167, 32
    %v1170 = vpop.permute.xlu0 %1169
    %1173 = vrot.lane.b32.xlu0 %v1071, 64
    %v1174 = vpop.permute.xlu0 %1173
    %v1176 = vsel %vm259, %v1170, %v1174
    %v1178 = vsel %vm362, %v1176, 0
    %1180 = vmatprep.subr.mxu0 0.0
    %1181 = vmatpush1.msra.mxu0 0.0
    %1182 = vmatprep.subr.mxu0 0.0
    %1183 = vmatpush1.msra.mxu0 0.0
    %1184 = vmatprep.subr.mxu0 0.0
    %1185 = vmatpush1.msra.mxu0 0.0
    %1186 = vmatprep.subr.mxu0 0.0
    %1187 = vmatpush1.msra.mxu0 0.0
    %1188 = vmatprep.subr.mxu0 0.0
    %1189 = vmatpush1.msra.mxu0 0.0
    %1190 = vmatprep.subr.mxu0 0.0
    %1191 = vmatpush1.msra.mxu0 0.0
    %1192 = vmatprep.subr.mxu0 0.0
    %1193 = vmatpush1.msra.mxu0 0.0
    %1194 = vmatprep.subr.mxu0 0.0
    %1195 = vmatpush1.msra.mxu0 0.0
    %1196 = vmatprep.subr.mxu0 0.0
    %1197 = vmatpush1.msra.mxu0 %v251
    %1198 = vmatprep.subr.mxu0 0.0
    %1199 = vmatpush1.msra.mxu0 %v250
    %1200 = vmatprep.subr.mxu0 0.0
    %1201 = vmatpush1.msra.mxu0 %v249
    %1202 = vmatprep.subr.mxu0 0.0
    %1203 = vmatpush1.msra.mxu0 %v248
    %1204 = vmatprep.subr.mxu0 0.0
    %1205 = vmatpush1.msra.mxu0 %v247
    %1206 = vmatprep.subr.mxu0 0.0
    %1207 = vmatpush1.msra.mxu0 %v246
    %1208 = vmatprep.subr.mxu0 0.0
    %1209 = vmatpush1.msra.mxu0 %v245
    %1210 = vmatprep.subr.mxu0 0.0
    %1211 = vmatpush1.msra.mxu0 %v244
    %1212 = vmatprep.subr.mxu0 0.0
    %1213 = vmatpush2.msra.mxu0 0.0
    %1214 = vmatprep.subr.mxu0 0.0
    %1215 = vmatpush2.msra.mxu0 0.0
    %1216 = vmatprep.subr.mxu0 0.0
    %1217 = vmatpush2.msra.mxu0 0.0
    %1218 = vmatprep.subr.mxu0 0.0
    %1219 = vmatpush2.msra.mxu0 0.0
    %1220 = vmatprep.subr.mxu0 0.0
    %1221 = vmatpush2.msra.mxu0 0.0
    %1222 = vmatprep.subr.mxu0 0.0
    %1223 = vmatpush2.msra.mxu0 0.0
    %1224 = vmatprep.subr.mxu0 0.0
    %1225 = vmatpush2.msra.mxu0 0.0
    %1226 = vmatprep.subr.mxu0 0.0
    %1227 = vmatpush2.msra.mxu0 0.0
    %1228 = vmatprep.subr.mxu0 0.0
    %1229 = vmatpush2.msra.mxu0 0.0
    %1230 = vmatprep.subr.mxu0 0.0
    %1231 = vmatpush2.msra.mxu0 0.0
    %1232 = vmatprep.subr.mxu0 0.0
    %1233 = vmatpush2.msra.mxu0 0.0
    %1234 = vmatprep.subr.mxu0 0.0
    %1235 = vmatpush2.msra.mxu0 0.0
    %1236 = vmatprep.subr.mxu0 0.0
    %1237 = vmatpush2.msra.mxu0 0.0
    %1238 = vmatprep.subr.mxu0 0.0
    %1239 = vmatpush2.msra.mxu0 0.0
    %1240 = vmatprep.subr.mxu0 0.0
    %1241 = vmatpush2.msra.mxu0 0.0
    %1242 = vmatprep.subr.mxu0 0.0
    %1243 = vmatpush2.msra.mxu0 0.0
    %1244 = vmatprep.mubr.f32.mxu0 0.0
    %1245 = vmatmul.mubr.f32.gmra.mxu0 %v1178
    %v1246 = vpop.f32.mrf.mxu0
    %v1247 = vadd.f32 %v257, %v1246
    %v1248 = vpop.f32.mrf.mxu0
    %1249 = vdwg.mxu0
    %v1250 = vxor.u32 %v1247, 2147483648
    %v1251 = vmul.f32 %v1250, 1.442695
    %v1252 = vpow.pop %v1251
    %v1253 = vadd.f32 %v1252, 1.0
    %v1254 = vrcp.pop %v1253
    %v1255 = vmul.f32 1.0, %v1254
    %v1256 = vtanh.pop %v1247
    %v1257 = vmul.f32 %v1255, %v1065
    %1259 = vrot.lane.b32.xlu0 %v1256, 64
    %v1260 = vpop.permute.xlu0 %1259
    %v1262 = vmul.f32 %v1255, %v1260
    %1264 = vrot.lane.b32.xlu0 %v1262, 32
    %v1265 = vpop.permute.xlu0 %1264
    %v1267 = vadd.f32 %v1257, %v1265
    %v1268 = vtanh.pop %v1267
    %1270 = vrot.lane.b32.xlu0 %v1268, 64
    %v1271 = vpop.permute.xlu0 %1270
    %v1273 = vmul.f32 %v1255, %v1271
    %v1275 = vrot.slane %v232, 4
    %v1277 = vsel %vm259, %v1170, 0
    %1279 = vmatprep.subr.mxu0 0.0
    %1280 = vmatpush1.msra.mxu0 0.0
    %1281 = vmatprep.subr.mxu0 0.0
    %1282 = vmatpush1.msra.mxu0 0.0
    %1283 = vmatprep.subr.mxu0 0.0
    %1284 = vmatpush1.msra.mxu0 0.0
    %1285 = vmatprep.subr.mxu0 0.0
    %1286 = vmatpush1.msra.mxu0 0.0
    %1287 = vmatprep.subr.mxu0 0.0
    %1288 = vmatpush1.msra.mxu0 0.0
    %1289 = vmatprep.subr.mxu0 0.0
    %1290 = vmatpush1.msra.mxu0 0.0
    %1291 = vmatprep.subr.mxu0 0.0
    %1292 = vmatpush1.msra.mxu0 0.0
    %1293 = vmatprep.subr.mxu0 0.0
    %1294 = vmatpush1.msra.mxu0 0.0
    %1295 = vmatprep.subr.mxu0 0.0
    %1296 = vmatpush1.msra.mxu0 0.0
    %1297 = vmatprep.subr.mxu0 0.0
    %1298 = vmatpush1.msra.mxu0 0.0
    %1299 = vmatprep.subr.mxu0 0.0
    %1300 = vmatpush1.msra.mxu0 0.0
    %1301 = vmatprep.subr.mxu0 0.0
    %1302 = vmatpush1.msra.mxu0 0.0
    %1303 = vmatprep.subr.mxu0 0.0
    %1304 = vmatpush1.msra.mxu0 %v243
    %1305 = vmatprep.subr.mxu0 0.0
    %1306 = vmatpush1.msra.mxu0 %v242
    %1307 = vmatprep.subr.mxu0 0.0
    %1308 = vmatpush1.msra.mxu0 %v241
    %1309 = vmatprep.subr.mxu0 0.0
    %1310 = vmatpush1.msra.mxu0 %v240
    %1311 = vmatprep.subr.mxu0 0.0
    %1312 = vmatpush2.msra.mxu0 0.0
    %1313 = vmatprep.subr.mxu0 0.0
    %1314 = vmatpush2.msra.mxu0 0.0
    %1315 = vmatprep.subr.mxu0 0.0
    %1316 = vmatpush2.msra.mxu0 0.0
    %1317 = vmatprep.subr.mxu0 0.0
    %1318 = vmatpush2.msra.mxu0 0.0
    %1319 = vmatprep.subr.mxu0 0.0
    %1320 = vmatpush2.msra.mxu0 0.0
    %1321 = vmatprep.subr.mxu0 0.0
    %1322 = vmatpush2.msra.mxu0 0.0
    %1323 = vmatprep.subr.mxu0 0.0
    %1324 = vmatpush2.msra.mxu0 0.0
    %1325 = vmatprep.subr.mxu0 0.0
    %1326 = vmatpush2.msra.mxu0 0.0
    %1327 = vmatprep.subr.mxu0 0.0
    %1328 = vmatpush2.msra.mxu0 0.0
    %1329 = vmatprep.subr.mxu0 0.0
    %1330 = vmatpush2.msra.mxu0 0.0
    %1331 = vmatprep.subr.mxu0 0.0
    %1332 = vmatpush2.msra.mxu0 0.0
    %1333 = vmatprep.subr.mxu0 0.0
    %1334 = vmatpush2.msra.mxu0 0.0
    %1335 = vmatprep.subr.mxu0 0.0
    %1336 = vmatpush2.msra.mxu0 0.0
    %1337 = vmatprep.subr.mxu0 0.0
    %1338 = vmatpush2.msra.mxu0 0.0
    %1339 = vmatprep.subr.mxu0 0.0
    %1340 = vmatpush2.msra.mxu0 0.0
    %1341 = vmatprep.subr.mxu0 0.0
    %1342 = vmatpush2.msra.mxu0 0.0
    %1343 = vmatprep.mubr.f32.mxu0 0.0
    %1344 = vmatmul.mubr.f32.gmra.mxu0 %v1277
    %v1345 = vpop.f32.mrf.mxu0
    %v1346 = vadd.f32 %v1275, %v1345
    %v1347 = vpop.f32.mrf.mxu0
    %1348 = vdwg.mxu0
    %v1349 = vxor.u32 %v1346, 2147483648
    %v1350 = vmul.f32 %v1349, 1.442695
    %v1351 = vpow.pop %v1350
    %v1352 = vadd.f32 %v1351, 1.0
    %v1353 = vrcp.pop %v1352
    %v1354 = vmul.f32 1.0, %v1353
    %v1355 = vtanh.pop %v1346
    %v1356 = vmul.f32 %v1354, %v1161
    %1358 = vrot.lane.b32.xlu0 %v1355, 64
    %v1359 = vpop.permute.xlu0 %1358
    %v1361 = vmul.f32 %v1354, %v1359
    %1363 = vrot.lane.b32.xlu0 %v1361, 32
    %v1364 = vpop.permute.xlu0 %1363
    %v1366 = vadd.f32 %v1356, %v1364
    %v1367 = vtanh.pop %v1366
    %1369 = vrot.lane.b32.xlu0 %v1367, 64
    %v1370 = vpop.permute.xlu0 %1369
    %v1372 = vmul.f32 %v1354, %v1370
    %1374 = vrot.lane.b32.xlu0 %v1372, 32
    %v1375 = vpop.permute.xlu0 %1374
    %1378 = vrot.lane.b32.xlu0 %v1273, 64
    %v1379 = vpop.permute.xlu0 %1378
    %v1381 = vsel %vm259, %v1375, %v1379
    %v1383 = vsel %vm362, %v1381, 0
    %1385 = vmatprep.subr.mxu0 0.0
    %1386 = vmatpush1.msra.mxu0 0.0
    %1387 = vmatprep.subr.mxu0 0.0
    %1388 = vmatpush1.msra.mxu0 0.0
    %1389 = vmatprep.subr.mxu0 0.0
    %1390 = vmatpush1.msra.mxu0 0.0
    %1391 = vmatprep.subr.mxu0 0.0
    %1392 = vmatpush1.msra.mxu0 0.0
    %1393 = vmatprep.subr.mxu0 0.0
    %1394 = vmatpush1.msra.mxu0 0.0
    %1395 = vmatprep.subr.mxu0 0.0
    %1396 = vmatpush1.msra.mxu0 0.0
    %1397 = vmatprep.subr.mxu0 0.0
    %1398 = vmatpush1.msra.mxu0 0.0
    %1399 = vmatprep.subr.mxu0 0.0
    %1400 = vmatpush1.msra.mxu0 0.0
    %1401 = vmatprep.subr.mxu0 0.0
    %1402 = vmatpush1.msra.mxu0 %v251
    %1403 = vmatprep.subr.mxu0 0.0
    %1404 = vmatpush1.msra.mxu0 %v250
    %1405 = vmatprep.subr.mxu0 0.0
    %1406 = vmatpush1.msra.mxu0 %v249
    %1407 = vmatprep.subr.mxu0 0.0
    %1408 = vmatpush1.msra.mxu0 %v248
    %1409 = vmatprep.subr.mxu0 0.0
    %1410 = vmatpush1.msra.mxu0 %v247
    %1411 = vmatprep.subr.mxu0 0.0
    %1412 = vmatpush1.msra.mxu0 %v246
    %1413 = vmatprep.subr.mxu0 0.0
    %1414 = vmatpush1.msra.mxu0 %v245
    %1415 = vmatprep.subr.mxu0 0.0
    %1416 = vmatpush1.msra.mxu0 %v244
    %1417 = vmatprep.subr.mxu0 0.0
    %1418 = vmatpush2.msra.mxu0 0.0
    %1419 = vmatprep.subr.mxu0 0.0
    %1420 = vmatpush2.msra.mxu0 0.0
    %1421 = vmatprep.subr.mxu0 0.0
    %1422 = vmatpush2.msra.mxu0 0.0
    %1423 = vmatprep.subr.mxu0 0.0
    %1424 = vmatpush2.msra.mxu0 0.0
    %1425 = vmatprep.subr.mxu0 0.0
    %1426 = vmatpush2.msra.mxu0 0.0
    %1427 = vmatprep.subr.mxu0 0.0
    %1428 = vmatpush2.msra.mxu0 0.0
    %1429 = vmatprep.subr.mxu0 0.0
    %1430 = vmatpush2.msra.mxu0 0.0
    %1431 = vmatprep.subr.mxu0 0.0
    %1432 = vmatpush2.msra.mxu0 0.0
    %1433 = vmatprep.subr.mxu0 0.0
    %1434 = vmatpush2.msra.mxu0 0.0
    %1435 = vmatprep.subr.mxu0 0.0
    %1436 = vmatpush2.msra.mxu0 0.0
    %1437 = vmatprep.subr.mxu0 0.0
    %1438 = vmatpush2.msra.mxu0 0.0
    %1439 = vmatprep.subr.mxu0 0.0
    %1440 = vmatpush2.msra.mxu0 0.0
    %1441 = vmatprep.subr.mxu0 0.0
    %1442 = vmatpush2.msra.mxu0 0.0
    %1443 = vmatprep.subr.mxu0 0.0
    %1444 = vmatpush2.msra.mxu0 0.0
    %1445 = vmatprep.subr.mxu0 0.0
    %1446 = vmatpush2.msra.mxu0 0.0
    %1447 = vmatprep.subr.mxu0 0.0
    %1448 = vmatpush2.msra.mxu0 0.0
    %1449 = vmatprep.mubr.f32.mxu0 0.0
    %1450 = vmatmul.mubr.f32.gmra.mxu0 %v1383
    %v1451 = vpop.f32.mrf.mxu0
    %v1452 = vadd.f32 %v257, %v1451
    %v1453 = vpop.f32.mrf.mxu0
    %1454 = vdwg.mxu0
    %v1455 = vxor.u32 %v1452, 2147483648
    %v1456 = vmul.f32 %v1455, 1.442695
    %v1457 = vpow.pop %v1456
    %v1458 = vadd.f32 %v1457, 1.0
    %v1459 = vrcp.pop %v1458
    %v1460 = vmul.f32 1.0, %v1459
    %v1461 = vtanh.pop %v1452
    %v1462 = vmul.f32 %v1460, %v1267
    %1464 = vrot.lane.b32.xlu0 %v1461, 64
    %v1465 = vpop.permute.xlu0 %1464
    %v1467 = vmul.f32 %v1460, %v1465
    %1469 = vrot.lane.b32.xlu0 %v1467, 32
    %v1470 = vpop.permute.xlu0 %1469
    %v1472 = vadd.f32 %v1462, %v1470
    %v1473 = vtanh.pop %v1472
    %1475 = vrot.lane.b32.xlu0 %v1473, 64
    %v1476 = vpop.permute.xlu0 %1475
    %v1478 = vmul.f32 %v1460, %v1476
    %v1479 = vsel %vm259, %v1375, 0
    %1481 = vmatprep.subr.mxu0 0.0
    %1482 = vmatpush1.msra.mxu0 0.0
    %1483 = vmatprep.subr.mxu0 0.0
    %1484 = vmatpush1.msra.mxu0 0.0
    %1485 = vmatprep.subr.mxu0 0.0
    %1486 = vmatpush1.msra.mxu0 0.0
    %1487 = vmatprep.subr.mxu0 0.0
    %1488 = vmatpush1.msra.mxu0 0.0
    %1489 = vmatprep.subr.mxu0 0.0
    %1490 = vmatpush1.msra.mxu0 0.0
    %1491 = vmatprep.subr.mxu0 0.0
    %1492 = vmatpush1.msra.mxu0 0.0
    %1493 = vmatprep.subr.mxu0 0.0
    %1494 = vmatpush1.msra.mxu0 0.0
    %1495 = vmatprep.subr.mxu0 0.0
    %1496 = vmatpush1.msra.mxu0 0.0
    %1497 = vmatprep.subr.mxu0 0.0
    %1498 = vmatpush1.msra.mxu0 0.0
    %1499 = vmatprep.subr.mxu0 0.0
    %1500 = vmatpush1.msra.mxu0 0.0
    %1501 = vmatprep.subr.mxu0 0.0
    %1502 = vmatpush1.msra.mxu0 0.0
    %1503 = vmatprep.subr.mxu0 0.0
    %1504 = vmatpush1.msra.mxu0 0.0
    %1505 = vmatprep.subr.mxu0 0.0
    %1506 = vmatpush1.msra.mxu0 %v243
    %1507 = vmatprep.subr.mxu0 0.0
    %1508 = vmatpush1.msra.mxu0 %v242
    %1509 = vmatprep.subr.mxu0 0.0
    %1510 = vmatpush1.msra.mxu0 %v241
    %1511 = vmatprep.subr.mxu0 0.0
    %1512 = vmatpush1.msra.mxu0 %v240
    %1513 = vmatprep.subr.mxu0 0.0
    %1514 = vmatpush2.msra.mxu0 0.0
    %1515 = vmatprep.subr.mxu0 0.0
    %1516 = vmatpush2.msra.mxu0 0.0
    %1517 = vmatprep.subr.mxu0 0.0
    %1518 = vmatpush2.msra.mxu0 0.0
    %1519 = vmatprep.subr.mxu0 0.0
    %1520 = vmatpush2.msra.mxu0 0.0
    %1521 = vmatprep.subr.mxu0 0.0
    %1522 = vmatpush2.msra.mxu0 0.0
    %1523 = vmatprep.subr.mxu0 0.0
    %1524 = vmatpush2.msra.mxu0 0.0
    %1525 = vmatprep.subr.mxu0 0.0
    %1526 = vmatpush2.msra.mxu0 0.0
    %1527 = vmatprep.subr.mxu0 0.0
    %1528 = vmatpush2.msra.mxu0 0.0
    %1529 = vmatprep.subr.mxu0 0.0
    %1530 = vmatpush2.msra.mxu0 0.0
    %1531 = vmatprep.subr.mxu0 0.0
    %1532 = vmatpush2.msra.mxu0 0.0
    %1533 = vmatprep.subr.mxu0 0.0
    %1534 = vmatpush2.msra.mxu0 0.0
    %1535 = vmatprep.subr.mxu0 0.0
    %1536 = vmatpush2.msra.mxu0 0.0
    %1537 = vmatprep.subr.mxu0 0.0
    %1538 = vmatpush2.msra.mxu0 0.0
    %1539 = vmatprep.subr.mxu0 0.0
    %1540 = vmatpush2.msra.mxu0 0.0
    %1541 = vmatprep.subr.mxu0 0.0
    %1542 = vmatpush2.msra.mxu0 0.0
    %1543 = vmatprep.subr.mxu0 0.0
    %1544 = vmatpush2.msra.mxu0 0.0
    %1545 = vmatprep.mubr.f32.mxu0 0.0
    %1546 = vmatmul.mubr.f32.gmra.mxu0 %v1479
    %v1547 = vpop.f32.mrf.mxu0
    %v1548 = vadd.f32 %v237, %v1547
    %v1549 = vpop.f32.mrf.mxu0
    %1550 = vdwg.mxu0
    %v1551 = vxor.u32 %v1548, 2147483648
    %v1552 = vmul.f32 %v1551, 1.442695
    %v1553 = vpow.pop %v1552
    %v1554 = vadd.f32 %v1553, 1.0
    %v1555 = vrcp.pop %v1554
    %v1556 = vmul.f32 1.0, %v1555
    %v1557 = vtanh.pop %v1548
    %v1558 = vmul.f32 %v1556, %v1366
    %1560 = vrot.lane.b32.xlu0 %v1557, 64
    %v1561 = vpop.permute.xlu0 %1560
    %v1563 = vmul.f32 %v1556, %v1561
    %1565 = vrot.lane.b32.xlu0 %v1563, 32
    %v1566 = vpop.permute.xlu0 %1565
    %v1568 = vadd.f32 %v1558, %v1566
    %v1569 = vtanh.pop %v1568
    %1571 = vrot.lane.b32.xlu0 %v1569, 64
    %v1572 = vpop.permute.xlu0 %1571
    %v1574 = vmul.f32 %v1556, %v1572
    %1576 = vrot.lane.b32.xlu0 %v1574, 32
    %v1577 = vpop.permute.xlu0 %1576
    %1580 = vrot.lane.b32.xlu0 %v1478, 64
    %v1581 = vpop.permute.xlu0 %1580
    %v1583 = vsel %vm259, %v1577, %v1581
    %v1585 = vsel %vm362, %v1583, 0
    %1587 = vmatprep.subr.mxu0 0.0
    %1588 = vmatpush1.msra.mxu0 0.0
    %1589 = vmatprep.subr.mxu0 0.0
    %1590 = vmatpush1.msra.mxu0 0.0
    %1591 = vmatprep.subr.mxu0 0.0
    %1592 = vmatpush1.msra.mxu0 0.0
    %1593 = vmatprep.subr.mxu0 0.0
    %1594 = vmatpush1.msra.mxu0 0.0
    %1595 = vmatprep.subr.mxu0 0.0
    %1596 = vmatpush1.msra.mxu0 0.0
    %1597 = vmatprep.subr.mxu0 0.0
    %1598 = vmatpush1.msra.mxu0 0.0
    %1599 = vmatprep.subr.mxu0 0.0
    %1600 = vmatpush1.msra.mxu0 0.0
    %1601 = vmatprep.subr.mxu0 0.0
    %1602 = vmatpush1.msra.mxu0 0.0
    %1603 = vmatprep.subr.mxu0 0.0
    %1604 = vmatpush1.msra.mxu0 %v251
    %1605 = vmatprep.subr.mxu0 0.0
    %1606 = vmatpush1.msra.mxu0 %v250
    %1607 = vmatprep.subr.mxu0 0.0
    %1608 = vmatpush1.msra.mxu0 %v249
    %1609 = vmatprep.subr.mxu0 0.0
    %1610 = vmatpush1.msra.mxu0 %v248
    %1611 = vmatprep.subr.mxu0 0.0
    %1612 = vmatpush1.msra.mxu0 %v247
    %1613 = vmatprep.subr.mxu0 0.0
    %1614 = vmatpush1.msra.mxu0 %v246
    %1615 = vmatprep.subr.mxu0 0.0
    %1616 = vmatpush1.msra.mxu0 %v245
    %1617 = vmatprep.subr.mxu0 0.0
    %1618 = vmatpush1.msra.mxu0 %v244
    %1619 = vmatprep.subr.mxu0 0.0
    %1620 = vmatpush2.msra.mxu0 0.0
    %1621 = vmatprep.subr.mxu0 0.0
    %1622 = vmatpush2.msra.mxu0 0.0
    %1623 = vmatprep.subr.mxu0 0.0
    %1624 = vmatpush2.msra.mxu0 0.0
    %1625 = vmatprep.subr.mxu0 0.0
    %1626 = vmatpush2.msra.mxu0 0.0
    %1627 = vmatprep.subr.mxu0 0.0
    %1628 = vmatpush2.msra.mxu0 0.0
    %1629 = vmatprep.subr.mxu0 0.0
    %1630 = vmatpush2.msra.mxu0 0.0
    %1631 = vmatprep.subr.mxu0 0.0
    %1632 = vmatpush2.msra.mxu0 0.0
    %1633 = vmatprep.subr.mxu0 0.0
    %1634 = vmatpush2.msra.mxu0 0.0
    %1635 = vmatprep.subr.mxu0 0.0
    %1636 = vmatpush2.msra.mxu0 0.0
    %1637 = vmatprep.subr.mxu0 0.0
    %1638 = vmatpush2.msra.mxu0 0.0
    %1639 = vmatprep.subr.mxu0 0.0
    %1640 = vmatpush2.msra.mxu0 0.0
    %1641 = vmatprep.subr.mxu0 0.0
    %1642 = vmatpush2.msra.mxu0 0.0
    %1643 = vmatprep.subr.mxu0 0.0
    %1644 = vmatpush2.msra.mxu0 0.0
    %1645 = vmatprep.subr.mxu0 0.0
    %1646 = vmatpush2.msra.mxu0 0.0
    %1647 = vmatprep.subr.mxu0 0.0
    %1648 = vmatpush2.msra.mxu0 0.0
    %1649 = vmatprep.subr.mxu0 0.0
    %1650 = vmatpush2.msra.mxu0 0.0
    %1651 = vmatprep.mubr.f32.mxu0 0.0
    %1652 = vmatmul.mubr.f32.gmra.mxu0 %v1585
    %v1653 = vpop.f32.mrf.mxu0
    %v1654 = vadd.f32 %v257, %v1653
    %v1655 = vpop.f32.mrf.mxu0
    %1656 = vdwg.mxu0
    %v1657 = vxor.u32 %v1654, 2147483648
    %v1658 = vmul.f32 %v1657, 1.442695
    %v1659 = vpow.pop %v1658
    %v1660 = vadd.f32 %v1659, 1.0
    %v1661 = vrcp.pop %v1660
    %v1662 = vmul.f32 1.0, %v1661
    %v1663 = vtanh.pop %v1654
    %v1664 = vmul.f32 %v1662, %v1472
    %1666 = vrot.lane.b32.xlu0 %v1663, 64
    %v1667 = vpop.permute.xlu0 %1666
    %v1669 = vmul.f32 %v1662, %v1667
    %1671 = vrot.lane.b32.xlu0 %v1669, 32
    %v1672 = vpop.permute.xlu0 %1671
    %v1674 = vadd.f32 %v1664, %v1672
    %v1675 = vtanh.pop %v1674
    %1677 = vrot.lane.b32.xlu0 %v1675, 64
    %v1678 = vpop.permute.xlu0 %1677
    %v1680 = vmul.f32 %v1662, %v1678
    %v1682 = vrot.slane %v237, 4
    %v1684 = vsel %vm259, %v1577, 0
    %1686 = vmatprep.subr.mxu0 0.0
    %1687 = vmatpush1.msra.mxu0 0.0
    %1688 = vmatprep.subr.mxu0 0.0
    %1689 = vmatpush1.msra.mxu0 0.0
    %1690 = vmatprep.subr.mxu0 0.0
    %1691 = vmatpush1.msra.mxu0 0.0
    %1692 = vmatprep.subr.mxu0 0.0
    %1693 = vmatpush1.msra.mxu0 0.0
    %1694 = vmatprep.subr.mxu0 0.0
    %1695 = vmatpush1.msra.mxu0 0.0
    %1696 = vmatprep.subr.mxu0 0.0
    %1697 = vmatpush1.msra.mxu0 0.0
    %1698 = vmatprep.subr.mxu0 0.0
    %1699 = vmatpush1.msra.mxu0 0.0
    %1700 = vmatprep.subr.mxu0 0.0
    %1701 = vmatpush1.msra.mxu0 0.0
    %1702 = vmatprep.subr.mxu0 0.0
    %1703 = vmatpush1.msra.mxu0 0.0
    %1704 = vmatprep.subr.mxu0 0.0
    %1705 = vmatpush1.msra.mxu0 0.0
    %1706 = vmatprep.subr.mxu0 0.0
    %1707 = vmatpush1.msra.mxu0 0.0
    %1708 = vmatprep.subr.mxu0 0.0
    %1709 = vmatpush1.msra.mxu0 0.0
    %1710 = vmatprep.subr.mxu0 0.0
    %1711 = vmatpush1.msra.mxu0 %v243
    %1712 = vmatprep.subr.mxu0 0.0
    %1713 = vmatpush1.msra.mxu0 %v242
    %1714 = vmatprep.subr.mxu0 0.0
    %1715 = vmatpush1.msra.mxu0 %v241
    %1716 = vmatprep.subr.mxu0 0.0
    %1717 = vmatpush1.msra.mxu0 %v240
    %1718 = vmatprep.subr.mxu0 0.0
    %1719 = vmatpush2.msra.mxu0 0.0
    %1720 = vmatprep.subr.mxu0 0.0
    %1721 = vmatpush2.msra.mxu0 0.0
    %1722 = vmatprep.subr.mxu0 0.0
    %1723 = vmatpush2.msra.mxu0 0.0
    %1724 = vmatprep.subr.mxu0 0.0
    %1725 = vmatpush2.msra.mxu0 0.0
    %1726 = vmatprep.subr.mxu0 0.0
    %1727 = vmatpush2.msra.mxu0 0.0
    %1728 = vmatprep.subr.mxu0 0.0
    %1729 = vmatpush2.msra.mxu0 0.0
    %1730 = vmatprep.subr.mxu0 0.0
    %1731 = vmatpush2.msra.mxu0 0.0
    %1732 = vmatprep.subr.mxu0 0.0
    %1733 = vmatpush2.msra.mxu0 0.0
    %1734 = vmatprep.subr.mxu0 0.0
    %1735 = vmatpush2.msra.mxu0 0.0
    %1736 = vmatprep.subr.mxu0 0.0
    %1737 = vmatpush2.msra.mxu0 0.0
    %1738 = vmatprep.subr.mxu0 0.0
    %1739 = vmatpush2.msra.mxu0 0.0
    %1740 = vmatprep.subr.mxu0 0.0
    %1741 = vmatpush2.msra.mxu0 0.0
    %1742 = vmatprep.subr.mxu0 0.0
    %1743 = vmatpush2.msra.mxu0 0.0
    %1744 = vmatprep.subr.mxu0 0.0
    %1745 = vmatpush2.msra.mxu0 0.0
    %1746 = vmatprep.subr.mxu0 0.0
    %1747 = vmatpush2.msra.mxu0 0.0
    %1748 = vmatprep.subr.mxu0 0.0
    %1749 = vmatpush2.msra.mxu0 0.0
    %1750 = vmatprep.mubr.f32.mxu0 0.0
    %1751 = vmatmul.mubr.f32.gmra.mxu0 %v1684
    %v1752 = vpop.f32.mrf.mxu0
    %v1753 = vadd.f32 %v1682, %v1752
    %v1754 = vpop.f32.mrf.mxu0
    %1755 = vdwg.mxu0
    %v1756 = vxor.u32 %v1753, 2147483648
    %v1757 = vmul.f32 %v1756, 1.442695
    %v1758 = vpow.pop %v1757
    %v1759 = vadd.f32 %v1758, 1.0
    %v1760 = vrcp.pop %v1759
    %v1761 = vmul.f32 1.0, %v1760
    %v1762 = vtanh.pop %v1753
    %v1763 = vmul.f32 %v1761, %v1568
    %1765 = vrot.lane.b32.xlu0 %v1762, 64
    %v1766 = vpop.permute.xlu0 %1765
    %v1768 = vmul.f32 %v1761, %v1766
    %1770 = vrot.lane.b32.xlu0 %v1768, 32
    %v1771 = vpop.permute.xlu0 %1770
    %v1773 = vadd.f32 %v1763, %v1771
    %v1774 = vtanh.pop %v1773
    %1776 = vrot.lane.b32.xlu0 %v1774, 64
    %v1777 = vpop.permute.xlu0 %1776
    %v1779 = vmul.f32 %v1761, %v1777
    %1781 = vrot.lane.b32.xlu0 %v1779, 32
    %v1782 = vpop.permute.xlu0 %1781
    %1785 = vrot.lane.b32.xlu0 %v1680, 64
    %v1786 = vpop.permute.xlu0 %1785
    %v1788 = vsel %vm259, %v1782, %v1786
    %v1790 = vsel %vm362, %v1788, 0
    %1792 = vmatprep.subr.mxu0 0.0
    %1793 = vmatpush1.msra.mxu0 0.0
    %1794 = vmatprep.subr.mxu0 0.0
    %1795 = vmatpush1.msra.mxu0 0.0
    %1796 = vmatprep.subr.mxu0 0.0
    %1797 = vmatpush1.msra.mxu0 0.0
    %1798 = vmatprep.subr.mxu0 0.0
    %1799 = vmatpush1.msra.mxu0 0.0
    %1800 = vmatprep.subr.mxu0 0.0
    %1801 = vmatpush1.msra.mxu0 0.0
    %1802 = vmatprep.subr.mxu0 0.0
    %1803 = vmatpush1.msra.mxu0 0.0
    %1804 = vmatprep.subr.mxu0 0.0
    %1805 = vmatpush1.msra.mxu0 0.0
    %1806 = vmatprep.subr.mxu0 0.0
    %1807 = vmatpush1.msra.mxu0 0.0
    %1808 = vmatprep.subr.mxu0 0.0
    %1809 = vmatpush1.msra.mxu0 %v251
    %1810 = vmatprep.subr.mxu0 0.0
    %1811 = vmatpush1.msra.mxu0 %v250
    %1812 = vmatprep.subr.mxu0 0.0
    %1813 = vmatpush1.msra.mxu0 %v249
    %1814 = vmatprep.subr.mxu0 0.0
    %1815 = vmatpush1.msra.mxu0 %v248
    %1816 = vmatprep.subr.mxu0 0.0
    %1817 = vmatpush1.msra.mxu0 %v247
    %1818 = vmatprep.subr.mxu0 0.0
    %1819 = vmatpush1.msra.mxu0 %v246
    %1820 = vmatprep.subr.mxu0 0.0
    %1821 = vmatpush1.msra.mxu0 %v245
    %1822 = vmatprep.subr.mxu0 0.0
    %1823 = vmatpush1.msra.mxu0 %v244
    %1824 = vmatprep.subr.mxu0 0.0
    %1825 = vmatpush2.msra.mxu0 0.0
    %1826 = vmatprep.subr.mxu0 0.0
    %1827 = vmatpush2.msra.mxu0 0.0
    %1828 = vmatprep.subr.mxu0 0.0
    %1829 = vmatpush2.msra.mxu0 0.0
    %1830 = vmatprep.subr.mxu0 0.0
    %1831 = vmatpush2.msra.mxu0 0.0
    %1832 = vmatprep.subr.mxu0 0.0
    %1833 = vmatpush2.msra.mxu0 0.0
    %1834 = vmatprep.subr.mxu0 0.0
    %1835 = vmatpush2.msra.mxu0 0.0
    %1836 = vmatprep.subr.mxu0 0.0
    %1837 = vmatpush2.msra.mxu0 0.0
    %1838 = vmatprep.subr.mxu0 0.0
    %1839 = vmatpush2.msra.mxu0 0.0
    %1840 = vmatprep.subr.mxu0 0.0
    %1841 = vmatpush2.msra.mxu0 0.0
    %1842 = vmatprep.subr.mxu0 0.0
    %1843 = vmatpush2.msra.mxu0 0.0
    %1844 = vmatprep.subr.mxu0 0.0
    %1845 = vmatpush2.msra.mxu0 0.0
    %1846 = vmatprep.subr.mxu0 0.0
    %1847 = vmatpush2.msra.mxu0 0.0
    %1848 = vmatprep.subr.mxu0 0.0
    %1849 = vmatpush2.msra.mxu0 0.0
    %1850 = vmatprep.subr.mxu0 0.0
    %1851 = vmatpush2.msra.mxu0 0.0
    %1852 = vmatprep.subr.mxu0 0.0
    %1853 = vmatpush2.msra.mxu0 0.0
    %1854 = vmatprep.subr.mxu0 0.0
    %1855 = vmatpush2.msra.mxu0 0.0
    %1856 = vmatprep.mubr.f32.mxu0 0.0
    %1857 = vmatmul.mubr.f32.gmra.mxu0 %v1790
    %v1858 = vpop.f32.mrf.mxu0
    %v1859 = vadd.f32 %v257, %v1858
    %v1860 = vpop.f32.mrf.mxu0
    %1861 = vdwg.mxu0
    %v1862 = vxor.u32 %v1859, 2147483648
    %v1863 = vmul.f32 %v1862, 1.442695
    %v1864 = vpow.pop %v1863
    %v1865 = vadd.f32 %v1864, 1.0
    %v1866 = vrcp.pop %v1865
    %v1867 = vmul.f32 1.0, %v1866
    %v1868 = vtanh.pop %v1859
    %v1869 = vmul.f32 %v1867, %v1674
    %1871 = vrot.lane.b32.xlu0 %v1868, 64
    %v1872 = vpop.permute.xlu0 %1871
    %v1874 = vmul.f32 %v1867, %v1872
    %1876 = vrot.lane.b32.xlu0 %v1874, 32
    %v1877 = vpop.permute.xlu0 %1876
    %v1879 = vadd.f32 %v1869, %v1877
    %v1880 = vtanh.pop %v1879
    %1882 = vrot.lane.b32.xlu0 %v1880, 64
    %v1883 = vpop.permute.xlu0 %1882
    %v1885 = vmul.f32 %v1867, %v1883
    %v1886 = vld [vmem:[#allocation7] sm:$0xff]
    %v1887 = vld [vmem:[#allocation7 + $0x8] sm:$0xff]
    %v1888 = vld [vmem:[#allocation7 + $0x10] sm:$0xff]
    %v1889 = vld [vmem:[#allocation7 + $0x18] sm:$0xff]
    %v1890 = vld [vmem:[#allocation8] sm:$0x1]
    %v1892 = vlaneseq
    %v1893 = vshrl.u32 %v1892, 7
    %v1894 = vsub.s32 0, %v1893
    %v1895 = vrot.slane %v1890, %v1894
    %1898 = vrot.lane.b32.xlu0 %v1885, 32
    %v1899 = vpop.permute.xlu0 %1898
    %v1900 = vsel %vm259, %v1899, 0
    %1902 = vmatprep.subr.mxu0 0.0
    %1903 = vmatpush1.msra.mxu0 0.0
    %1904 = vmatprep.subr.mxu0 0.0
    %1905 = vmatpush1.msra.mxu0 0.0
    %1906 = vmatprep.subr.mxu0 0.0
    %1907 = vmatpush1.msra.mxu0 0.0
    %1908 = vmatprep.subr.mxu0 0.0
    %1909 = vmatpush1.msra.mxu0 0.0
    %1910 = vmatprep.subr.mxu0 0.0
    %1911 = vmatpush1.msra.mxu0 0.0
    %1912 = vmatprep.subr.mxu0 0.0
    %1913 = vmatpush1.msra.mxu0 0.0
    %1914 = vmatprep.subr.mxu0 0.0
    %1915 = vmatpush1.msra.mxu0 0.0
    %1916 = vmatprep.subr.mxu0 0.0
    %1917 = vmatpush1.msra.mxu0 0.0
    %1918 = vmatprep.subr.mxu0 0.0
    %1919 = vmatpush1.msra.mxu0 0.0
    %1920 = vmatprep.subr.mxu0 0.0
    %1921 = vmatpush1.msra.mxu0 0.0
    %1922 = vmatprep.subr.mxu0 0.0
    %1923 = vmatpush1.msra.mxu0 0.0
    %1924 = vmatprep.subr.mxu0 0.0
    %1925 = vmatpush1.msra.mxu0 0.0
    %1926 = vmatprep.subr.mxu0 0.0
    %1927 = vmatpush1.msra.mxu0 %v1889
    %1928 = vmatprep.subr.mxu0 0.0
    %1929 = vmatpush1.msra.mxu0 %v1888
    %1930 = vmatprep.subr.mxu0 0.0
    %1931 = vmatpush1.msra.mxu0 %v1887
    %1932 = vmatprep.subr.mxu0 0.0
    %1933 = vmatpush1.msra.mxu0 %v1886
    %1934 = vmatprep.subr.mxu0 0.0
    %1935 = vmatpush2.msra.mxu0 0.0
    %1936 = vmatprep.subr.mxu0 0.0
    %1937 = vmatpush2.msra.mxu0 0.0
    %1938 = vmatprep.subr.mxu0 0.0
    %1939 = vmatpush2.msra.mxu0 0.0
    %1940 = vmatprep.subr.mxu0 0.0
    %1941 = vmatpush2.msra.mxu0 0.0
    %1942 = vmatprep.subr.mxu0 0.0
    %1943 = vmatpush2.msra.mxu0 0.0
    %1944 = vmatprep.subr.mxu0 0.0
    %1945 = vmatpush2.msra.mxu0 0.0
    %1946 = vmatprep.subr.mxu0 0.0
    %1947 = vmatpush2.msra.mxu0 0.0
    %1948 = vmatprep.subr.mxu0 0.0
    %1949 = vmatpush2.msra.mxu0 0.0
    %1950 = vmatprep.subr.mxu0 0.0
    %1951 = vmatpush2.msra.mxu0 0.0
    %1952 = vmatprep.subr.mxu0 0.0
    %1953 = vmatpush2.msra.mxu0 0.0
    %1954 = vmatprep.subr.mxu0 0.0
    %1955 = vmatpush2.msra.mxu0 0.0
    %1956 = vmatprep.subr.mxu0 0.0
    %1957 = vmatpush2.msra.mxu0 0.0
    %1958 = vmatprep.subr.mxu0 0.0
    %1959 = vmatpush2.msra.mxu0 0.0
    %1960 = vmatprep.subr.mxu0 0.0
    %1961 = vmatpush2.msra.mxu0 0.0
    %1962 = vmatprep.subr.mxu0 0.0
    %1963 = vmatpush2.msra.mxu0 0.0
    %1964 = vmatprep.subr.mxu0 0.0
    %1965 = vmatpush2.msra.mxu0 0.0
    %1966 = vmatprep.mubr.f32.mxu0 0.0
    %1967 = vmatmul.mubr.f32.gmra.mxu0 %v1900
    %v1968 = vpop.f32.mrf.mxu0
    %v1969 = vadd.f32 %v1895, %v1968
    %v1970 = vpop.f32.mrf.mxu0
    %1971 = vdwg.mxu0
    %v1972 = vmax.f32 %v1969, 0.0
    %vm1973 = vcmask 257024
    %v1974 = vsel %vm1973, %v1972, 0.0
    %v1975 = vrot.slane %v1974, 4
    %v1976 = vadd.f32 %v1974, %v1975
    %v1977 = vrot.slane %v1976, 2
    %v1978 = vadd.f32 %v1976, %v1977
    %v1979 = vrot.slane %v1978, 1
    %v1980 = vadd.f32 %v1978, %v1979
    %v1981 = vrcp.pop 4.0
    %v1982 = vmul.f32 %v1980, %v1981
    %v1983 = vsub.f32 %v1972, %v1982
    %v1984 = vmul.f32 %v1983, %v1983
    %v1985 = vsel %vm1973, %v1984, 0.0
    %v1986 = vrot.slane %v1985, 4
    %v1987 = vadd.f32 %v1985, %v1986
    %v1988 = vrot.slane %v1987, 2
    %v1989 = vadd.f32 %v1987, %v1988
    %v1990 = vrot.slane %v1989, 1
    %v1991 = vadd.f32 %v1989, %v1990
    %v1992 = vmul.f32 %v1991, %v1981
    %v1993 = vadd.f32 %v1992, 1e-05
    %v1994 = vrsqrt.pop %v1993
    %v1995 = vmul.f32 %v1983, %v1994
    %v1996 = vld [vmem:[#allocation10] sm:$0x1]
    %v1998 = vlaneseq
    %v1999 = vshrl.u32 %v1998, 7
    %v2000 = vsub.s32 0, %v1999
    %v2001 = vrot.slane %v1996, %v2000
    %v2003 = vmul.f32 %v1995, %v2001
    %v2004 = vld [vmem:[#allocation11] sm:$0x1]
    %v2006 = vlaneseq
    %v2007 = vshrl.u32 %v2006, 7
    %v2008 = vsub.s32 0, %v2007
    %v2009 = vrot.slane %v2004, %v2008
    %v2011 = vadd.f32 %v2003, %v2009
    %v2012 = vld [vmem:[%s10] sm:$0xff]
    %v2013 = vld [vmem:[%s10 + $0x8] sm:$0xff]
    %v2014 = vld [vmem:[%s10 + $0x10] sm:$0xff]
    %v2015 = vld [vmem:[%s10 + $0x18] sm:$0xff]
    %v2016 = vld [vmem:[%s11] sm:$0x1]
    %v2018 = vlaneseq
    %v2019 = vshrl.u32 %v2018, 7
    %v2020 = vsub.s32 0, %v2019
    %v2021 = vrot.slane %v2016, %v2020
    %v2024 = vsel %vm259, %v2011, 0
    %2026 = vmatprep.subr.mxu0 0.0
    %2027 = vmatpush1.msra.mxu0 0.0
    %2028 = vmatprep.subr.mxu0 0.0
    %2029 = vmatpush1.msra.mxu0 0.0
    %2030 = vmatprep.subr.mxu0 0.0
    %2031 = vmatpush1.msra.mxu0 0.0
    %2032 = vmatprep.subr.mxu0 0.0
    %2033 = vmatpush1.msra.mxu0 0.0
    %2034 = vmatprep.subr.mxu0 0.0
    %2035 = vmatpush1.msra.mxu0 0.0
    %2036 = vmatprep.subr.mxu0 0.0
    %2037 = vmatpush1.msra.mxu0 0.0
    %2038 = vmatprep.subr.mxu0 0.0
    %2039 = vmatpush1.msra.mxu0 0.0
    %2040 = vmatprep.subr.mxu0 0.0
    %2041 = vmatpush1.msra.mxu0 0.0
    %2042 = vmatprep.subr.mxu0 0.0
    %2043 = vmatpush1.msra.mxu0 0.0
    %2044 = vmatprep.subr.mxu0 0.0
    %2045 = vmatpush1.msra.mxu0 0.0
    %2046 = vmatprep.subr.mxu0 0.0
    %2047 = vmatpush1.msra.mxu0 0.0
    %2048 = vmatprep.subr.mxu0 0.0
    %2049 = vmatpush1.msra.mxu0 0.0
    %2050 = vmatprep.subr.mxu0 0.0
    %2051 = vmatpush1.msra.mxu0 %v2015
    %2052 = vmatprep.subr.mxu0 0.0
    %2053 = vmatpush1.msra.mxu0 %v2014
    %2054 = vmatprep.subr.mxu0 0.0
    %2055 = vmatpush1.msra.mxu0 %v2013
    %2056 = vmatprep.subr.mxu0 0.0
    %2057 = vmatpush1.msra.mxu0 %v2012
    %2058 = vmatprep.subr.mxu0 0.0
    %2059 = vmatpush2.msra.mxu0 0.0
    %2060 = vmatprep.subr.mxu0 0.0
    %2061 = vmatpush2.msra.mxu0 0.0
    %2062 = vmatprep.subr.mxu0 0.0
    %2063 = vmatpush2.msra.mxu0 0.0
    %2064 = vmatprep.subr.mxu0 0.0
    %2065 = vmatpush2.msra.mxu0 0.0
    %2066 = vmatprep.subr.mxu0 0.0
    %2067 = vmatpush2.msra.mxu0 0.0
    %2068 = vmatprep.subr.mxu0 0.0
    %2069 = vmatpush2.msra.mxu0 0.0
    %2070 = vmatprep.subr.mxu0 0.0
    %2071 = vmatpush2.msra.mxu0 0.0
    %2072 = vmatprep.subr.mxu0 0.0
    %2073 = vmatpush2.msra.mxu0 0.0
    %2074 = vmatprep.subr.mxu0 0.0
    %2075 = vmatpush2.msra.mxu0 0.0
    %2076 = vmatprep.subr.mxu0 0.0
    %2077 = vmatpush2.msra.mxu0 0.0
    %2078 = vmatprep.subr.mxu0 0.0
    %2079 = vmatpush2.msra.mxu0 0.0
    %2080 = vmatprep.subr.mxu0 0.0
    %2081 = vmatpush2.msra.mxu0 0.0
    %2082 = vmatprep.subr.mxu0 0.0
    %2083 = vmatpush2.msra.mxu0 0.0
    %2084 = vmatprep.subr.mxu0 0.0
    %2085 = vmatpush2.msra.mxu0 0.0
    %2086 = vmatprep.subr.mxu0 0.0
    %2087 = vmatpush2.msra.mxu0 0.0
    %2088 = vmatprep.subr.mxu0 0.0
    %2089 = vmatpush2.msra.mxu0 0.0
    %2090 = vmatprep.mubr.f32.mxu0 0.0
    %2091 = vmatmul.mubr.f32.gmra.mxu0 %v2024
    %v2092 = vpop.f32.mrf.mxu0
    %v2093 = vadd.f32 %v2021, %v2092
    %v2094 = vpop.f32.mrf.mxu0
    %2095 = vdwg.mxu0
    %v2096 = vmax.f32 %v2093, 0.0
    %vm2097 = vcmask 125952
    %v2098 = vsel %vm2097, %v2096, 0.0
    %v2099 = vrot.slane %v2098, 4
    %v2100 = vadd.f32 %v2098, %v2099
    %v2101 = vrot.slane %v2100, 2
    %v2102 = vadd.f32 %v2100, %v2101
    %v2103 = vrot.slane %v2102, 1
    %v2104 = vadd.f32 %v2102, %v2103
    %v2105 = vmul.f32 %v2104, %v1981
    %v2106 = vsub.f32 %v2096, %v2105
    %v2107 = vmul.f32 %v2106, %v2106
    %v2108 = vsel %vm2097, %v2107, 0.0
    %v2109 = vrot.slane %v2108, 4
    %v2110 = vadd.f32 %v2108, %v2109
    %v2111 = vrot.slane %v2110, 2
    %v2112 = vadd.f32 %v2110, %v2111
    %v2113 = vrot.slane %v2112, 1
    %v2114 = vadd.f32 %v2112, %v2113
    %v2115 = vmul.f32 %v2114, %v1981
    %v2116 = vadd.f32 %v2115, 1e-05
    %v2117 = vrsqrt.pop %v2116
    %v2118 = vmul.f32 %v2106, %v2117
    %v2119 = vld [vmem:[%s12] sm:$0x1]
    %v2121 = vlaneseq
    %v2122 = vshrl.u32 %v2121, 7
    %v2123 = vsub.s32 0, %v2122
    %v2124 = vrot.slane %v2119, %v2123
    %v2126 = vmul.f32 %v2118, %v2124
    %v2127 = vld [vmem:[%s13] sm:$0x1]
    %v2129 = vlaneseq
    %v2130 = vshrl.u32 %v2129, 7
    %v2131 = vsub.s32 0, %v2130
    %v2132 = vrot.slane %v2127, %v2131
    %v2134 = vadd.f32 %v2126, %v2132
    %v2135 = vld [vmem:[%s14] sm:$0xff]
    %v2136 = vld [vmem:[%s14 + $0x8] sm:$0xff]
    %v2137 = vld [vmem:[%s15] sm:$0x1]
    %v2139 = vlaneseq
    %v2140 = vshrl.u32 %v2139, 7
    %v2141 = vsub.s32 0, %v2140
    %v2142 = vrot.slane %v2137, %v2141
    %vm2144 = vcmask 130048
    %v2146 = vsel %vm2144, %v2134, 0
    %2148 = vmatprep.subr.mxu0 0.0
    %2149 = vmatpush1.msra.mxu0 0.0
    %2150 = vmatprep.subr.mxu0 0.0
    %2151 = vmatpush1.msra.mxu0 0.0
    %2152 = vmatprep.subr.mxu0 0.0
    %2153 = vmatpush1.msra.mxu0 0.0
    %2154 = vmatprep.subr.mxu0 0.0
    %2155 = vmatpush1.msra.mxu0 0.0
    %2156 = vmatprep.subr.mxu0 0.0
    %2157 = vmatpush1.msra.mxu0 0.0
    %2158 = vmatprep.subr.mxu0 0.0
    %2159 = vmatpush1.msra.mxu0 0.0
    %2160 = vmatprep.subr.mxu0 0.0
    %2161 = vmatpush1.msra.mxu0 0.0
    %2162 = vmatprep.subr.mxu0 0.0
    %2163 = vmatpush1.msra.mxu0 0.0
    %2164 = vmatprep.subr.mxu0 0.0
    %2165 = vmatpush1.msra.mxu0 0.0
    %2166 = vmatprep.subr.mxu0 0.0
    %2167 = vmatpush1.msra.mxu0 0.0
    %2168 = vmatprep.subr.mxu0 0.0
    %2169 = vmatpush1.msra.mxu0 0.0
    %2170 = vmatprep.subr.mxu0 0.0
    %2171 = vmatpush1.msra.mxu0 0.0
    %2172 = vmatprep.subr.mxu0 0.0
    %2173 = vmatpush1.msra.mxu0 0.0
    %2174 = vmatprep.subr.mxu0 0.0
    %2175 = vmatpush1.msra.mxu0 0.0
    %2176 = vmatprep.subr.mxu0 0.0
    %2177 = vmatpush1.msra.mxu0 %v2136
    %2178 = vmatprep.subr.mxu0 0.0
    %2179 = vmatpush1.msra.mxu0 %v2135
    %2180 = vmatprep.subr.mxu0 0.0
    %2181 = vmatpush2.msra.mxu0 0.0
    %2182 = vmatprep.subr.mxu0 0.0
    %2183 = vmatpush2.msra.mxu0 0.0
    %2184 = vmatprep.subr.mxu0 0.0
    %2185 = vmatpush2.msra.mxu0 0.0
    %2186 = vmatprep.subr.mxu0 0.0
    %2187 = vmatpush2.msra.mxu0 0.0
    %2188 = vmatprep.subr.mxu0 0.0
    %2189 = vmatpush2.msra.mxu0 0.0
    %2190 = vmatprep.subr.mxu0 0.0
    %2191 = vmatpush2.msra.mxu0 0.0
    %2192 = vmatprep.subr.mxu0 0.0
    %2193 = vmatpush2.msra.mxu0 0.0
    %2194 = vmatprep.subr.mxu0 0.0
    %2195 = vmatpush2.msra.mxu0 0.0
    %2196 = vmatprep.subr.mxu0 0.0
    %2197 = vmatpush2.msra.mxu0 0.0
    %2198 = vmatprep.subr.mxu0 0.0
    %2199 = vmatpush2.msra.mxu0 0.0
    %2200 = vmatprep.subr.mxu0 0.0
    %2201 = vmatpush2.msra.mxu0 0.0
    %2202 = vmatprep.subr.mxu0 0.0
    %2203 = vmatpush2.msra.mxu0 0.0
    %2204 = vmatprep.subr.mxu0 0.0
    %2205 = vmatpush2.msra.mxu0 0.0
    %2206 = vmatprep.subr.mxu0 0.0
    %2207 = vmatpush2.msra.mxu0 0.0
    %2208 = vmatprep.subr.mxu0 0.0
    %2209 = vmatpush2.msra.mxu0 0.0
    %2210 = vmatprep.subr.mxu0 0.0
    %2211 = vmatpush2.msra.mxu0 0.0
    %2212 = vmatprep.mubr.f32.mxu0 0.0
    %2213 = vmatmul.mubr.f32.gmra.mxu0 %v2146
    %v2214 = vpop.f32.mrf.mxu0
    %v2215 = vadd.f32 %v2142, %v2214
    %v2216 = vpop.f32.mrf.mxu0
    %2217 = vdwg.mxu0
    %vm2218 = vcmask 35840
    %2219 = vst.msk [vmem:[#allocation13] sm:$0xf] %vm2218, %v2215
    // Predicated region
    $region90: #{tpu_custom_call.1} parent=1 // pred_check
      _
    $region91: #{tpu_custom_call.1} parent=1 // pred_check_branch
      %2221 = sbr.rel (0) target = $region93
    $region92: #{tpu_custom_call.1} parent=1 // pred_region
      %s2223 = ssub.s32 64, 64
      %2224 = vsyncadd [#allocation4], %s2223
      %s2226 = sshll.u32 [#allocation13], 4
      %s2227 = int_to_ptr.vmem [resolvable:$true] %s2226
      %2229 = dma.vmem_to_hbm [thread:$0]  %s2227, 64, %s16, [#allocation4]
    $region93: #{tpu_custom_call.1} parent=1 // pred_fallthru
      _
    // Predicated region
    $region94: #{tpu_custom_call.1} parent=1 // pred_check
      _
    $region95: #{tpu_custom_call.1} parent=1 // pred_check_branch
      %2231 = sbr.rel (0) target = $region97
    $region96: #{tpu_custom_call.1} parent=1 // pred_region
      %2232 = dma.done [#allocation4], 64
    $region97: #{tpu_custom_call.1} parent=1 // pred_fallthru
      _
    %2233 = vsyncpa [#allocation3], 1
    %2234 = vsyncpa [#allocation6], 1
    %2235 = vsyncpa [#allocation9], 1
    %2236 = vsyncpa [#allocation12], 1
    %2237 = vsyncpa [#allocation4], 1

</llo_original>
